<compile_context>
chip_gen: v6e
topology: v6e:2x2x1
jax: 0.10.0
libtpu: 0.0.40
codegen_flags: <defaults>
</compile_context>

<pallas_src>
import functools

import jax
import jax.numpy as jnp
from jax import lax
from jax.experimental import pallas as pl
from jax.experimental.pallas import tpu as pltpu

H1 = 512
H2 = 256
OUT = 1

_VMEM_BUDGET = 48 * 1024 * 1024        # conservative vs v7x's 64 MiB per TC


def _mlp_kernel(x_ref, w1_ref, b1_ref, w2_ref, b2_ref, w3_ref, b3_ref,
                o_ref, acc_ref):
    """One (batch-tile i, K-tile k) grid step.  Activations are carried
    transposed (features, tm) so the (1, tm) output row is lane-dense."""
    k = pl.program_id(1)

    @pl.when(k == 0)
    def _():
        acc_ref[...] = jnp.zeros_like(acc_ref)

    # Layer-1 partial sum: W1_k (H1, tk) contracted with x_blk (tm, tk) over
    # the tk axis -> (H1, tm).  trans_b-style contraction keeps x in natural
    # (B, D) layout (no HBM transpose) and batch on the lane axis; f32 MXU acc.
    acc_ref[...] += lax.dot_general(
        w1_ref[...], x_ref[...],
        dimension_numbers=(((1,), (1,)), ((), ())),
        preferred_element_type=jnp.float32)

    @pl.when(k == pl.num_programs(1) - 1)
    def _():
        wdt = w2_ref.dtype
        h1 = jnp.maximum(acc_ref[...] + b1_ref[...], 0.0)          # (H1, tm) f32
        # Dropout(p=0.2) -> identity at inference.
        h2 = jnp.dot(w2_ref[...], h1.astype(wdt),
                     preferred_element_type=jnp.float32)            # (H2, tm)
        h2 = jnp.maximum(h2 + b2_ref[...], 0.0)
        # Layer 3 (out_features == 1): VPU multiply + sublane reduction instead
        # of a padded N=1 MXU matmul; result already lane-dense (1, tm).
        logits = jnp.sum(h2 * w3_ref[...], axis=0, keepdims=True) + b3_ref[...]
        o_ref[...] = jax.nn.sigmoid(logits).astype(o_ref.dtype)


def _pick_tm(batch, input_dim, itemsize):
    if batch <= 128:
        return 128                      # lane-width floor: unmasked stores
    for cand in (1024, 512, 256, 128):
        # >= 2 tiles so both v7x TensorCores get work; only allow big tiles
        # when the (tm, D) slab is small (v6e: amortise per-step overhead).
        if batch >= 2 * cand and cand * input_dim * itemsize <= 8 * 1024 * 1024:
            return cand
    return 128


def _pick_tk(input_dim, tm, itemsize):
    """Largest K-tile that keeps the per-step working set under budget."""
    fixed = (2 * H2 * H1 * itemsize         # W2 (double-buffer allocation)
             + H1 * tm * 4                  # f32 accumulator scratch
             + 2 * tm * 4                   # output blocks
             + 4 * (H1 + 2 * H2 + 1) * 4)   # biases / W3 column (tiny)
    per_col = 2 * (tm + H1) * itemsize      # double-buffered x + W1 tile cols
    max_tk = (_VMEM_BUDGET - fixed) // per_col
    if input_dim <= max_tk:
        return input_dim                    # whole D in one pass (n_k == 1)
    return max(128, int(max_tk // 128) * 128)


@functools.partial(jax.jit, static_argnames=("tm", "tk", "compute_dtype"))
def fake_news_classifier_forward(x, params, *, tm=None, tk=None,
                                 compute_dtype=jnp.bfloat16):
    """x: (B, input_dim) float32.  params in PyTorch nn.Linear layout:
    (W1 (512,D), b1 (512,), W2 (256,512), b2 (256,), W3 (1,256), b3 (1,)).
    Returns (B, 1) float32 in (0, 1)."""
    w1, b1, w2, b2, w3, b3 = params
    B, D = x.shape
    itemsize = jnp.dtype(compute_dtype).itemsize
    if tm is None:
        tm = _pick_tm(B, D, itemsize)
    if tk is None:
        tk = _pick_tk(D, tm, itemsize)

    n_b = -(-B // tm)
    n_k = -(-D // tk)
    B_pad = n_b * tm
    D_pad = n_k * tk

    # Natural (B, D) layout: pad batch to a tile multiple and D to a tk
    # multiple (zero columns contribute nothing); cast streamed operands to the
    # compute dtype (bf16 default -> half the x-tile DMA bytes / W1 residency).
    x_p = jnp.pad(x, ((0, B_pad - B), (0, D_pad - D))).astype(compute_dtype)
    w1c = jnp.pad(w1, ((0, 0), (0, D_pad - D))).astype(compute_dtype)
    w2c = w2.astype(compute_dtype)
    b1c = b1.reshape(H1, 1).astype(jnp.float32)
    b2c = b2.reshape(H2, 1).astype(jnp.float32)
    w3c = w3.reshape(H2, 1).astype(jnp.float32)     # layer 3 on the VPU in f32
    b3c = b3.reshape(1, 1).astype(jnp.float32)

    cost = pl.CostEstimate(
        flops=2 * B_pad * (D_pad * H1 + H1 * H2 + H2),
        transcendentals=B_pad,
        bytes_accessed=(B_pad * D_pad + n_b * H1 * D_pad + H1 * H2) * itemsize
        + (H1 + 2 * H2 + 1 + B_pad) * 4,
    )

    est_vmem = (2 * tm * tk * itemsize + 2 * H1 * tk * itemsize
                + 2 * H2 * H1 * itemsize + H1 * tm * 4 + 2 * tm * 4
                + 4 * (H1 + 2 * H2 + 1) * 4)
    vmem_limit = int(min(56 * 1024 * 1024,
                         max(32 * 1024 * 1024, est_vmem * 5 // 4)))

    const = lambda i, k: (0, 0)

    out = pl.pallas_call(
        _mlp_kernel,
        out_shape=jax.ShapeDtypeStruct((1, B_pad), jnp.float32),
        grid_spec=pltpu.PrefetchScalarGridSpec(
            num_scalar_prefetch=0,
            grid=(n_b, n_k),
            in_specs=[
                pl.BlockSpec((tm, tk), lambda i, k: (i, k)),    # x tile (natural layout)
                pl.BlockSpec((H1, tk), lambda i, k: (0, k)),    # W1 K-slice
                pl.BlockSpec((H1, 1), const),                   # b1
                pl.BlockSpec((H2, H1), const),                  # W2 (resident)
                pl.BlockSpec((H2, 1), const),                   # b2
                pl.BlockSpec((H2, 1), const),                   # W3 column
                pl.BlockSpec((1, 1), const),                    # b3
            ],
            out_specs=pl.BlockSpec((1, tm), lambda i, k: (0, i)),   # lane-dense row
            scratch_shapes=[pltpu.VMEM((H1, tm), jnp.float32)],     # layer-1 acc
        ),
        compiler_params=pltpu.CompilerParams(
            dimension_semantics=("parallel", "arbitrary"),  # batch tiles across TCs
            vmem_limit_bytes=vmem_limit,
        ),
        cost_estimate=cost,
    )(x_p, w1c, b1c, w2c, b2c, w3c, b3c)

    return out[0, :B].reshape(B, OUT)


def init_params(key, input_dim):
    """nn.Linear-style init (uniform +-1/sqrt(fan_in)) in PyTorch layout."""
    def linear(k, fan_in, fan_out):
        kw, kb = jax.random.split(k)
        bound = 1.0 / jnp.sqrt(fan_in)
        w = jax.random.uniform(kw, (fan_out, fan_in), jnp.float32, -bound, bound)
        b = jax.random.uniform(kb, (fan_out,), jnp.float32, -bound, bound)
        return w, b

    k1, k2, k3 = jax.random.split(key, 3)
    w1, b1 = linear(k1, input_dim, H1)
    w2, b2 = linear(k2, H1, H2)
    w3, b3 = linear(k3, H2, OUT)
    return (w1, b1, w2, b2, w3, b3)


def _reference(x, params):
    w1, b1, w2, b2, w3, b3 = params
    h1 = jnp.maximum(x @ w1.T + b1, 0.0)
    h2 = jnp.maximum(h1 @ w2.T + b2, 0.0)
    return jax.nn.sigmoid(h2 @ w3.T + b3)


if __name__ == "__main__":
    key = jax.random.PRNGKey(0)
    kx, kp = jax.random.split(key)

    B, INPUT_DIM = 300, 64          # non-multiple batch exercises padding path
    x = jax.random.normal(kx, (B, INPUT_DIM), jnp.float32)
    params = init_params(kp, INPUT_DIM)
    ref = _reference(x, params)

    # Default path: bf16 operands, f32 MXU accumulation, f32 bias/activations.
    out = jax.block_until_ready(fake_news_classifier_forward(x, params))
    assert out.shape == (B, 1)
    assert jnp.allclose(out, ref, atol=2e-2, rtol=2e-2), "bf16 mismatch"

    # f32 operand path: tight tolerance.
    out_f32 = jax.block_until_ready(
        fake_news_classifier_forward(x, params, compute_dtype=jnp.float32))
    assert jnp.allclose(out_f32, ref, atol=1e-5, rtol=1e-4), "f32 mismatch"

    # K-tiled path (grid axis over input_dim + accumulator scratch), forced
    # via a small tk; also exercises the small-batch (tm=128) fallback.
    k2x, k2p = jax.random.split(jax.random.PRNGKey(1))
    B2, D2 = 64, 384
    x2 = jax.random.normal(k2x, (B2, D2), jnp.float32)
    params2 = init_params(k2p, D2)
    ref2 = _reference(x2, params2)
    out2 = jax.block_until_ready(
        fake_news_classifier_forward(x2, params2, tk=128,
                                     compute_dtype=jnp.float32))
    assert out2.shape == (B2, 1)
    assert jnp.allclose(out2, ref2, atol=1e-4, rtol=1e-4), "K-tiled mismatch"

    print("KERNEL_OK")
</pallas_src>

<mosaic_0001>
module attributes {stable_mosaic.version = 11 : i64} {
  func.func @_mlp_kernel(%arg0: i32, %arg1: i32, %arg2: memref<128x64xbf16, #tpu.memory_space<vmem>>, %arg3: memref<512x64xbf16, #tpu.memory_space<vmem>>, %arg4: memref<512x1xf32, #tpu.memory_space<vmem>>, %arg5: memref<256x512xbf16, #tpu.memory_space<vmem>>, %arg6: memref<256x1xf32, #tpu.memory_space<vmem>>, %arg7: memref<256x1xf32, #tpu.memory_space<vmem>>, %arg8: memref<1x1xf32, #tpu.memory_space<vmem>>, %arg9: memref<1x128xf32, #tpu.memory_space<vmem>>, %arg10: memref<512x128xf32, #tpu.memory_space<vmem>>) attributes {dimension_semantics = [#tpu.dimension_semantics<parallel>, #tpu.dimension_semantics<arbitrary>], iteration_bounds = array<i64: 3, 1>, scalar_prefetch = 0 : i64, scratch_operands = 1 : i64, tpu.core_type = #tpu.core_type<tc>, window_params = [{transform_indices = @transform_0, window_bounds = array<i64: 128, 64>}, {transform_indices = @transform_1, window_bounds = array<i64: 512, 64>}, {pipeline_mode = #tpu.pipeline_mode<synchronous>, transform_indices = @transform_2, window_bounds = array<i64: 512, 1>}, {pipeline_mode = #tpu.pipeline_mode<synchronous>, transform_indices = @transform_3, window_bounds = array<i64: 256, 512>}, {pipeline_mode = #tpu.pipeline_mode<synchronous>, transform_indices = @transform_4, window_bounds = array<i64: 256, 1>}, {pipeline_mode = #tpu.pipeline_mode<synchronous>, transform_indices = @transform_5, window_bounds = array<i64: 256, 1>}, {pipeline_mode = #tpu.pipeline_mode<synchronous>, transform_indices = @transform_6, window_bounds = array<i64: 1, 1>}, {transform_indices = @transform_7, window_bounds = array<i64: 1, 128>}]} {
    %c0_i32 = arith.constant 0 : i32
    %0 = arith.cmpi eq, %arg1, %c0_i32 : i32
    %1 = arith.extui %0 : i1 to i32
    %c0_i32_0 = arith.constant 0 : i32
    %2 = arith.cmpi ne, %1, %c0_i32_0 : i32
    scf.if %2 {
      %cst_10 = arith.constant 0.000000e+00 : f32
      %12 = vector.broadcast %cst_10 : f32 to vector<512x128xf32>
      %c0_11 = arith.constant 0 : index
      %c0_12 = arith.constant 0 : index
      %13 = vector.load %arg10[%c0_11, %c0_12] : memref<512x128xf32, #tpu.memory_space<vmem>>, vector<512x128xf32>
      tpu.vector_store %arg10[%c0_11, %c0_12], %12 {strides = array<i32>} : memref<512x128xf32, #tpu.memory_space<vmem>>, vector<512x128xf32>,
    } else {
    }
    %c0 = arith.constant 0 : index
    %c0_1 = arith.constant 0 : index
    %3 = vector.load %arg10[%c0, %c0_1] : memref<512x128xf32, #tpu.memory_space<vmem>>, vector<512x128xf32>
    %c0_2 = arith.constant 0 : index
    %c0_3 = arith.constant 0 : index
    %4 = vector.load %arg3[%c0_2, %c0_3] : memref<512x64xbf16, #tpu.memory_space<vmem>>, vector<512x64xbf16>
    %c0_4 = arith.constant 0 : index
    %c0_5 = arith.constant 0 : index
    %5 = vector.load %arg2[%c0_4, %c0_5] : memref<128x64xbf16, #tpu.memory_space<vmem>>, vector<128x64xbf16>
    %cst = arith.constant dense<0.000000e+00> : vector<512x128xf32>
    %6 = tpu.matmul %4, %5, %cst {dimension_numbers = #tpu.dot_dimension_numbers<[1], [1], [0], [0], [0, 0, 1, 0], [], []>} : vector<512x64xbf16>, vector<128x64xbf16>, vector<512x128xf32> -> vector<512x128xf32>
    %7 = arith.addf %3, %6 : vector<512x128xf32>
    %c0_6 = arith.constant 0 : index
    %c0_7 = arith.constant 0 : index
    %8 = vector.load %arg10[%c0_6, %c0_7] : memref<512x128xf32, #tpu.memory_space<vmem>>, vector<512x128xf32>
    tpu.vector_store %arg10[%c0_6, %c0_7], %7 {strides = array<i32>} : memref<512x128xf32, #tpu.memory_space<vmem>>, vector<512x128xf32>,
    %c0_i32_8 = arith.constant 0 : i32
    %9 = arith.cmpi eq, %arg1, %c0_i32_8 : i32
    %10 = arith.extui %9 : i1 to i32
    %c0_i32_9 = arith.constant 0 : i32
    %11 = arith.cmpi ne, %10, %c0_i32_9 : i32
    scf.if %11 {
      %c0_10 = arith.constant 0 : index
      %c0_11 = arith.constant 0 : index
      %12 = vector.load %arg10[%c0_10, %c0_11] : memref<512x128xf32, #tpu.memory_space<vmem>>, vector<512x128xf32>
      %c0_12 = arith.constant 0 : index
      %c0_13 = arith.constant 0 : index
      %13 = vector.load %arg4[%c0_12, %c0_13] : memref<512x1xf32, #tpu.memory_space<vmem>>, vector<512x1xf32>
      %14 = vector.broadcast %13 : vector<512x1xf32> to vector<512x128xf32>
      %15 = arith.addf %12, %14 : vector<512x128xf32>
      %cst_14 = arith.constant 0.000000e+00 : f32
      %16 = vector.broadcast %cst_14 : f32 to vector<512x128xf32>
      %17 = arith.maximumf %15, %16 : vector<512x128xf32>
      %c0_15 = arith.constant 0 : index
      %c0_16 = arith.constant 0 : index
      %18 = vector.load %arg5[%c0_15, %c0_16] : memref<256x512xbf16, #tpu.memory_space<vmem>>, vector<256x512xbf16>
      %19 = arith.truncf %17 : vector<512x128xf32> to vector<512x128xbf16>
      %cst_17 = arith.constant dense<0.000000e+00> : vector<256x128xf32>
      %20 = tpu.matmul %18, %19, %cst_17 {dimension_numbers = #tpu.dot_dimension_numbers<[1], [0], [0], [1], [0, 0, 1, 1], [], []>} : vector<256x512xbf16>, vector<512x128xbf16>, vector<256x128xf32> -> vector<256x128xf32>
      %c0_18 = arith.constant 0 : index
      %c0_19 = arith.constant 0 : index
      %21 = vector.load %arg6[%c0_18, %c0_19] : memref<256x1xf32, #tpu.memory_space<vmem>>, vector<256x1xf32>
      %22 = vector.broadcast %21 : vector<256x1xf32> to vector<256x128xf32>
      %23 = arith.addf %20, %22 : vector<256x128xf32>
      %cst_20 = arith.constant 0.000000e+00 : f32
      %24 = vector.broadcast %cst_20 : f32 to vector<256x128xf32>
      %25 = arith.maximumf %23, %24 : vector<256x128xf32>
      %c0_21 = arith.constant 0 : index
      %c0_22 = arith.constant 0 : index
      %26 = vector.load %arg7[%c0_21, %c0_22] : memref<256x1xf32, #tpu.memory_space<vmem>>, vector<256x1xf32>
      %27 = vector.broadcast %26 : vector<256x1xf32> to vector<256x128xf32>
      %28 = arith.mulf %25, %27 : vector<256x128xf32>
      %cst_23 = arith.constant dense<0.000000e+00> : vector<128xf32>
      %29 = vector.multi_reduction <add>, %28, %cst_23 [0] : vector<256x128xf32> to vector<128xf32>
      %30 = vector.shape_cast %29 : vector<128xf32> to vector<1x128xf32>
      %c0_24 = arith.constant 0 : index
      %c0_25 = arith.constant 0 : index
      %31 = vector.load %arg8[%c0_24, %c0_25] : memref<1x1xf32, #tpu.memory_space<vmem>>, vector<1x1xf32>
      %32 = vector.broadcast %31 : vector<1x1xf32> to vector<1x128xf32>
      %33 = arith.addf %30, %32 : vector<1x128xf32>
      %34 = arith.negf %33 : vector<1x128xf32>
      %35 = math.exp %34 : vector<1x128xf32>
      %cst_26 = arith.constant 1.000000e+00 : f32
      %36 = vector.broadcast %cst_26 : f32 to vector<1x128xf32>
      %37 = arith.addf %36, %35 : vector<1x128xf32>
      %38 = arith.divf %36, %37 : vector<1x128xf32>
      %c0_27 = arith.constant 0 : index
      %c0_28 = arith.constant 0 : index
      %39 = vector.load %arg9[%c0_27, %c0_28] : memref<1x128xf32, #tpu.memory_space<vmem>>, vector<1x128xf32>
      tpu.vector_store %arg9[%c0_27, %c0_28], %38 {strides = array<i32>} : memref<1x128xf32, #tpu.memory_space<vmem>>, vector<1x128xf32>,
    } else {
    }
    return
  }
  func.func @transform_0(%arg0: i32, %arg1: i32) -> (i32, i32) {
    %c0_i32 = arith.constant 0 : i32
    return %arg0, %arg1 : i32, i32
  }
  func.func @transform_1(%arg0: i32, %arg1: i32) -> (i32, i32) {
    %c0_i32 = arith.constant 0 : i32
    %c0_i32_0 = arith.constant 0 : i32
    return %c0_i32, %arg1 : i32, i32
  }
  func.func @transform_2(%arg0: i32, %arg1: i32) -> (i32, i32) {
    %c0_i32 = arith.constant 0 : i32
    %c0_i32_0 = arith.constant 0 : i32
    %c0_i32_1 = arith.constant 0 : i32
    return %c0_i32, %c0_i32_0 : i32, i32
  }
  func.func @transform_3(%arg0: i32, %arg1: i32) -> (i32, i32) {
    %c0_i32 = arith.constant 0 : i32
    %c0_i32_0 = arith.constant 0 : i32
    %c0_i32_1 = arith.constant 0 : i32
    return %c0_i32, %c0_i32_0 : i32, i32
  }
  func.func @transform_4(%arg0: i32, %arg1: i32) -> (i32, i32) {
    %c0_i32 = arith.constant 0 : i32
    %c0_i32_0 = arith.constant 0 : i32
    %c0_i32_1 = arith.constant 0 : i32
    return %c0_i32, %c0_i32_0 : i32, i32
  }
  func.func @transform_5(%arg0: i32, %arg1: i32) -> (i32, i32) {
    %c0_i32 = arith.constant 0 : i32
    %c0_i32_0 = arith.constant 0 : i32
    %c0_i32_1 = arith.constant 0 : i32
    return %c0_i32, %c0_i32_0 : i32, i32
  }
  func.func @transform_6(%arg0: i32, %arg1: i32) -> (i32, i32) {
    %c0_i32 = arith.constant 0 : i32
    %c0_i32_0 = arith.constant 0 : i32
    %c0_i32_1 = arith.constant 0 : i32
    return %c0_i32, %c0_i32_0 : i32, i32
  }
  func.func @transform_7(%arg0: i32, %arg1: i32) -> (i32, i32) {
    %c0_i32 = arith.constant 0 : i32
    %c0_i32_0 = arith.constant 0 : i32
    return %c0_i32, %arg0 : i32, i32
  }
}

</mosaic_0001>

<llo_original>
// kernel: fake_news_classifier_forward.1
$region0: #{fake_news_classifier_forward.1}
  #allocation0 [shape = 'u32[]', space=smem, size = 0x4, offset = 0x4, fixed_abs, tag = 'smem constant byte address 0x4 - core index']
  #allocation1 [shape = 'u32[144,128]{1,0:T(1,128)}', space=vmem, size = 0x12000, scoped, tag = 'internal scratch']
  #allocation2 [shape = 'f32[512,128]{1,0:T(8,128)}', space=vmem, size = 0x40000, scoped, tag = 'scratch operand']
  #allocation3 [shape = 'f32[1,1]{1,0:T(1,128)S(1)}', space=vmem, size = 0x200, scoped, tag = 'scoped memory for fake_news_classifier_forward.1']
  %s0 = inlined_call_operand.vmem [shape: bf16[384,64], index: 0, kind: input, shape index: {}]
  %s1 = inlined_call_operand.vmem [shape: bf16[512,64], index: 1, kind: input, shape index: {}]
  %s2 = inlined_call_operand.vmem [shape: f32[512,1], index: 2, kind: input, shape index: {}]
  %s3 = inlined_call_operand.vmem [shape: bf16[256,512], index: 3, kind: input, shape index: {}]
  %s4 = inlined_call_operand.vmem [shape: f32[256,1], index: 4, kind: input, shape index: {}]
  %s5 = inlined_call_operand.vmem [shape: f32[256,1], index: 5, kind: input, shape index: {}]
  %s6 = inlined_call_operand.<no memory space> [shape: f32[1,1], index: 6, kind: input, shape index: {}]
  %s7 = inlined_call_operand.vmem [shape: f32[1,384], index: 7, kind: output, shape index: {}]
  %s8 = sld [smem:[#allocation0]]
  $region69: #{fake_news_classifier_forward.1} parent=0
    _
  %s10 = ssub.s32 1, %s8
  %s11 = scalar_select 0, %s10, %s8
  %v12 = vstv %s6
  %13 = vst [vmem:[#allocation3] sm:$0x1] %v12
  loop: start=0, step=1, limit=5
  $region2: #{fake_news_classifier_forward.1} parent=0 // loop_pre_header
    _
  $region3: #{fake_news_classifier_forward.1} parent=0 // loop_header
    %s15 = sphi 0, %s19
    %p16 = scmp.ge.s32.totalorder %s15, 5
    %s22 = sphi 0, %s34
    %s23 = sphi 0, %s30
    %s24 = sphi 0, %s22
    %s25 = sphi 0, %s23
    %s26 = sphi 0, %s24
    %s27 = sphi 0, %s25
    %s39 = sphi 0, %s41
    %s42 = sphi 0, %s39
    %s43 = sphi 0, %s42
    %s59 = sphi 0, %s43
    %s65 = sphi 0, %s67
    %s68 = sphi 0, %s65
    %s69 = sphi 0, %s68
    %s85 = sphi 0, %s69
    %s89 = sphi 0, %s89
    %s91 = sphi 0, %s89
    %s92 = sphi 0, %s91
    %s106 = sphi 0, %s92
    %s110 = sphi 0, %s110
    %s112 = sphi 0, %s110
    %s113 = sphi 0, %s112
    %s127 = sphi 0, %s113
    %s131 = sphi 0, %s131
    %s133 = sphi 0, %s131
    %s134 = sphi 0, %s133
    %s148 = sphi 0, %s134
    %s152 = sphi 0, %s152
    %s154 = sphi 0, %s152
    %s155 = sphi 0, %s154
    %s169 = sphi 0, %s155
    %s173 = sphi 0, %s173
    %s175 = sphi 0, %s173
    %s176 = sphi 0, %s175
    %s190 = sphi 0, %s176
    %s196 = sphi 0, %s198
    %s199 = sphi 0, %s196
    %s200 = sphi 0, %s199
    %s216 = sphi 0, %s200
  $region4: #{fake_news_classifier_forward.1} parent=0 // loop_header_branch
    %18 = sbr.rel (%p16) target = $region8
  $region5: #{fake_news_classifier_forward.1} parent=0 // loop_body
    %s20 = ssub.s32 %s15, 1
    %s21 = ssub.s32 %s15, 2
    %s28 = sadd.s32 1, %s23
    %p29 = scmp.ge.s32.totalorder %s28, 1
    %s30 = scalar_select %p29, 0, %s28
    %s31 = sadd.s32 1, %s22
    %s32 = scalar_select %p29, %s31, %s22
    %p33 = scmp.ge.s32.totalorder %s32, 3
    %s34 = scalar_select %p33, 0, %s32
    %s35 = ssub.s32 %s22, %s34
    %s36 = ssub.s32 %s23, %s30
    %s37 = sor.u32 %s35, %s36
    %p38 = scmp.eq.s32.totalorder %s37, 0
    %s40 = sadd.s32 %s39, 1
    %s41 = scalar_select %p38, %s39, %s40
    %p44 = pneg %p38
    %p45 = scmp.eq.s32.totalorder %s15, 2
    %p46 = por %p44, %p45
    %p47 = scmp.ne.s32.totalorder %s39, %s42
    %p48 = scmp.eq.s32.totalorder %s15, 0
    %p49 = por %p47, %p48
    %p50 = scmp.ne.s32.totalorder %s39, %s42
    %p51 = scmp.eq.s32.totalorder %s20, 2
    %p52 = por %p50, %p51
    %p53 = scmp.ne.s32.totalorder %s42, %s43
    %p54 = scmp.eq.s32.totalorder %s20, 0
    %p55 = por %p53, %p54
    %p56 = scmp.ne.s32.totalorder %s42, %s43
    %p57 = scmp.eq.s32.totalorder %s21, 2
    %p58 = por %p56, %p57
    %p60 = scmp.ne.s32.totalorder %s43, %s59
    %p61 = scmp.eq.s32.totalorder %s21, 0
    %p62 = por %p60, %p61
    %s63 = ssub.s32 %s23, %s30
    %p64 = scmp.eq.s32.totalorder %s63, 0
    %s66 = sadd.s32 %s65, 1
    %s67 = scalar_select %p64, %s65, %s66
    %p70 = pneg %p64
    %p71 = scmp.eq.s32.totalorder %s15, 2
    %p72 = por %p70, %p71
    %p73 = scmp.ne.s32.totalorder %s65, %s68
    %p74 = scmp.eq.s32.totalorder %s15, 0
    %p75 = por %p73, %p74
    %p76 = scmp.ne.s32.totalorder %s65, %s68
    %p77 = scmp.eq.s32.totalorder %s20, 2
    %p78 = por %p76, %p77
    %p79 = scmp.ne.s32.totalorder %s68, %s69
    %p80 = scmp.eq.s32.totalorder %s20, 0
    %p81 = por %p79, %p80
    %p82 = scmp.ne.s32.totalorder %s68, %s69
    %p83 = scmp.eq.s32.totalorder %s21, 2
    %p84 = por %p82, %p83
    %p86 = scmp.ne.s32.totalorder %s69, %s85
    %p87 = scmp.eq.s32.totalorder %s21, 0
    %p88 = por %p86, %p87
    %s90 = sadd.s32 %s89, 1
    %p93 = scmp.eq.s32.totalorder %s15, 2
    %p94 = scmp.ne.s32.totalorder %s89, %s91
    %p95 = scmp.eq.s32.totalorder %s15, 0
    %p96 = por %p94, %p95
    %p97 = scmp.ne.s32.totalorder %s89, %s91
    %p98 = scmp.eq.s32.totalorder %s20, 2
    %p99 = por %p97, %p98
    %p100 = scmp.ne.s32.totalorder %s91, %s92
    %p101 = scmp.eq.s32.totalorder %s20, 0
    %p102 = por %p100, %p101
    %p103 = scmp.ne.s32.totalorder %s91, %s92
    %p104 = scmp.eq.s32.totalorder %s21, 2
    %p105 = por %p103, %p104
    %p107 = scmp.ne.s32.totalorder %s92, %s106
    %p108 = scmp.eq.s32.totalorder %s21, 0
    %p109 = por %p107, %p108
    %s111 = sadd.s32 %s110, 1
    %p114 = scmp.eq.s32.totalorder %s15, 2
    %p115 = scmp.ne.s32.totalorder %s110, %s112
    %p116 = scmp.eq.s32.totalorder %s15, 0
    %p117 = por %p115, %p116
    %p118 = scmp.ne.s32.totalorder %s110, %s112
    %p119 = scmp.eq.s32.totalorder %s20, 2
    %p120 = por %p118, %p119
    %p121 = scmp.ne.s32.totalorder %s112, %s113
    %p122 = scmp.eq.s32.totalorder %s20, 0
    %p123 = por %p121, %p122
    %p124 = scmp.ne.s32.totalorder %s112, %s113
    %p125 = scmp.eq.s32.totalorder %s21, 2
    %p126 = por %p124, %p125
    %p128 = scmp.ne.s32.totalorder %s113, %s127
    %p129 = scmp.eq.s32.totalorder %s21, 0
    %p130 = por %p128, %p129
    %s132 = sadd.s32 %s131, 1
    %p135 = scmp.eq.s32.totalorder %s15, 2
    %p136 = scmp.ne.s32.totalorder %s131, %s133
    %p137 = scmp.eq.s32.totalorder %s15, 0
    %p138 = por %p136, %p137
    %p139 = scmp.ne.s32.totalorder %s131, %s133
    %p140 = scmp.eq.s32.totalorder %s20, 2
    %p141 = por %p139, %p140
    %p142 = scmp.ne.s32.totalorder %s133, %s134
    %p143 = scmp.eq.s32.totalorder %s20, 0
    %p144 = por %p142, %p143
    %p145 = scmp.ne.s32.totalorder %s133, %s134
    %p146 = scmp.eq.s32.totalorder %s21, 2
    %p147 = por %p145, %p146
    %p149 = scmp.ne.s32.totalorder %s134, %s148
    %p150 = scmp.eq.s32.totalorder %s21, 0
    %p151 = por %p149, %p150
    %s153 = sadd.s32 %s152, 1
    %p156 = scmp.eq.s32.totalorder %s15, 2
    %p157 = scmp.ne.s32.totalorder %s152, %s154
    %p158 = scmp.eq.s32.totalorder %s15, 0
    %p159 = por %p157, %p158
    %p160 = scmp.ne.s32.totalorder %s152, %s154
    %p161 = scmp.eq.s32.totalorder %s20, 2
    %p162 = por %p160, %p161
    %p163 = scmp.ne.s32.totalorder %s154, %s155
    %p164 = scmp.eq.s32.totalorder %s20, 0
    %p165 = por %p163, %p164
    %p166 = scmp.ne.s32.totalorder %s154, %s155
    %p167 = scmp.eq.s32.totalorder %s21, 2
    %p168 = por %p166, %p167
    %p170 = scmp.ne.s32.totalorder %s155, %s169
    %p171 = scmp.eq.s32.totalorder %s21, 0
    %p172 = por %p170, %p171
    %s174 = sadd.s32 %s173, 1
    %p177 = scmp.eq.s32.totalorder %s15, 2
    %p178 = scmp.ne.s32.totalorder %s173, %s175
    %p179 = scmp.eq.s32.totalorder %s15, 0
    %p180 = por %p178, %p179
    %p181 = scmp.ne.s32.totalorder %s173, %s175
    %p182 = scmp.eq.s32.totalorder %s20, 2
    %p183 = por %p181, %p182
    %p184 = scmp.ne.s32.totalorder %s175, %s176
    %p185 = scmp.eq.s32.totalorder %s20, 0
    %p186 = por %p184, %p185
    %p187 = scmp.ne.s32.totalorder %s175, %s176
    %p188 = scmp.eq.s32.totalorder %s21, 2
    %p189 = por %p187, %p188
    %p191 = scmp.ne.s32.totalorder %s176, %s190
    %p192 = scmp.eq.s32.totalorder %s21, 0
    %p193 = por %p191, %p192
    %s194 = ssub.s32 %s22, %s34
    %p195 = scmp.eq.s32.totalorder %s194, 0
    %s197 = sadd.s32 %s196, 1
    %s198 = scalar_select %p195, %s196, %s197
    %p201 = pneg %p195
    %p202 = scmp.eq.s32.totalorder %s15, 2
    %p203 = por %p201, %p202
    %p204 = scmp.ne.s32.totalorder %s196, %s199
    %p205 = scmp.eq.s32.totalorder %s15, 0
    %p206 = por %p204, %p205
    %p207 = scmp.ne.s32.totalorder %s196, %s199
    %p208 = scmp.eq.s32.totalorder %s20, 2
    %p209 = por %p207, %p208
    %p210 = scmp.ne.s32.totalorder %s199, %s200
    %p211 = scmp.eq.s32.totalorder %s20, 0
    %p212 = por %p210, %p211
    %p213 = scmp.ne.s32.totalorder %s199, %s200
    %p214 = scmp.eq.s32.totalorder %s21, 2
    %p215 = por %p213, %p214
    %p217 = scmp.ne.s32.totalorder %s200, %s216
    %p218 = scmp.eq.s32.totalorder %s21, 0
    %p219 = por %p217, %p218
    %p220 = scmp.le.s32.totalorder 1, %s15
    %p221 = scmp.lt.s32.totalorder %s15, 4
    %p222 = pnand %p220, %p221
    %p223 = pneg %p222
    // Predicated region
    $region9: #{fake_news_classifier_forward.1} parent=5 // pred_check
      _
    $region10: #{fake_news_classifier_forward.1} parent=5 // pred_check_branch
      %225 = sbr.rel (%p222) target = $region12
    $region11: #{fake_news_classifier_forward.1} parent=5 // pred_region
      %s226 = ssub.s32 %s15, 1
      // Predicated region
      $region13: #{fake_news_classifier_forward.1} parent=11 // pred_check
        %p227 = pneg %p81
      $region14: #{fake_news_classifier_forward.1} parent=11 // pred_check_branch
        %229 = sbr.rel (%p227) target = $region16
      $region15: #{fake_news_classifier_forward.1} parent=11 // pred_region
        %p230 = scmp.lt.s32.totalorder %s25, 0
        %s231 = scalar_select %p230, %s25, 0
        %s232 = smul.addr %s231, 4
        %s233 = scalar_lea.vmem %s1, %s232
      $region16: #{fake_news_classifier_forward.1} parent=11 // pred_fallthru
        _
      // Predicated region
      $region17: #{fake_news_classifier_forward.1} parent=11 // pred_check
        %p234 = pneg %p102
      $region18: #{fake_news_classifier_forward.1} parent=11 // pred_check_branch
        %236 = sbr.rel (%p234) target = $region20
      $region19: #{fake_news_classifier_forward.1} parent=11 // pred_region
        _
      $region20: #{fake_news_classifier_forward.1} parent=11 // pred_fallthru
        _
      // Predicated region
      $region21: #{fake_news_classifier_forward.1} parent=11 // pred_check
        %p237 = pneg %p123
      $region22: #{fake_news_classifier_forward.1} parent=11 // pred_check_branch
        %239 = sbr.rel (%p237) target = $region24
      $region23: #{fake_news_classifier_forward.1} parent=11 // pred_region
        _
      $region24: #{fake_news_classifier_forward.1} parent=11 // pred_fallthru
        _
      // Predicated region
      $region25: #{fake_news_classifier_forward.1} parent=11 // pred_check
        %p240 = pneg %p144
      $region26: #{fake_news_classifier_forward.1} parent=11 // pred_check_branch
        %242 = sbr.rel (%p240) target = $region28
      $region27: #{fake_news_classifier_forward.1} parent=11 // pred_region
        _
      $region28: #{fake_news_classifier_forward.1} parent=11 // pred_fallthru
        _
      // Predicated region
      $region29: #{fake_news_classifier_forward.1} parent=11 // pred_check
        %p243 = pneg %p165
      $region30: #{fake_news_classifier_forward.1} parent=11 // pred_check_branch
        %245 = sbr.rel (%p243) target = $region32
      $region31: #{fake_news_classifier_forward.1} parent=11 // pred_region
        _
      $region32: #{fake_news_classifier_forward.1} parent=11 // pred_fallthru
        _
      // Predicated region
      $region33: #{fake_news_classifier_forward.1} parent=11 // pred_check
        %p246 = pneg %p186
      $region34: #{fake_news_classifier_forward.1} parent=11 // pred_check_branch
        %248 = sbr.rel (%p246) target = $region36
      $region35: #{fake_news_classifier_forward.1} parent=11 // pred_region
        _
      $region36: #{fake_news_classifier_forward.1} parent=11 // pred_fallthru
        _
    $region12: #{fake_news_classifier_forward.1} parent=5 // pred_fallthru
      _
    %p249 = scmp.lt.s32.totalorder %s15, 3
    // Predicated region
    $region37: #{fake_news_classifier_forward.1} parent=5 // pred_check
      %p250 = pneg %p249
    $region38: #{fake_news_classifier_forward.1} parent=5 // pred_check_branch
      %252 = sbr.rel (%p250) target = $region40
    $region39: #{fake_news_classifier_forward.1} parent=5 // pred_region
      // Predicated region
      $region41: #{fake_news_classifier_forward.1} parent=39 // pred_check
        %p253 = pneg %p49
      $region42: #{fake_news_classifier_forward.1} parent=39 // pred_check_branch
        %255 = sbr.rel (%p253) target = $region44
      $region43: #{fake_news_classifier_forward.1} parent=39 // pred_region
        %s256 = smul.u32 16, %s22
        %p257 = scmp.lt.s32.totalorder %s256, 47
        %s258 = scalar_select %p257, %s256, 47
        %p259 = scmp.lt.s32.totalorder %s23, 0
        %s260 = scalar_select %p259, %s23, 0
        %s261 = sadd.s32 %s260, %s258
        %s262 = smul.addr %s261, 4
        %s263 = scalar_lea.vmem %s0, %s262
        %s264 = smul.u32 16, %s22
      $region44: #{fake_news_classifier_forward.1} parent=39 // pred_fallthru
        _
    $region40: #{fake_news_classifier_forward.1} parent=5 // pred_fallthru
      _
    %p265 = scmp.le.s32.totalorder 1, %s15
    %p266 = scmp.lt.s32.totalorder %s15, 4
    %p267 = pnand %p265, %p266
    %p268 = pneg %p267
    // Predicated region
    $region45: #{fake_news_classifier_forward.1} parent=5 // pred_check
      _
    $region46: #{fake_news_classifier_forward.1} parent=5 // pred_check_branch
      %270 = sbr.rel (%p267) target = $region48
    $region47: #{fake_news_classifier_forward.1} parent=5 // pred_region
      %s271 = ssub.s32 %s15, 1
      %s272 = smul.u32 16, %s24
      %p273 = scmp.lt.s32.totalorder %s272, 47
      %s274 = scalar_select %p273, %s272, 47
      %p275 = scmp.lt.s32.totalorder %s25, 0
      %s276 = scalar_select %p275, %s25, 0
      %s277 = sadd.s32 %s276, %s274
      %s278 = smul.addr %s277, 4
      %s279 = scalar_lea.vmem %s0, %s278
      %p280 = pneg %p55
      %p281 = pneg %p52
      %p282 = scmp.lt.s32.totalorder %s25, 0
      %s283 = scalar_select %p282, %s25, 0
      %s284 = smul.addr %s283, 4
      %s285 = scalar_lea.vmem %s1, %s284
      %p286 = pneg %p81
      %p287 = pneg %p78
      %p288 = pneg %p102
      %p289 = pneg %p99
      %p290 = pneg %p123
      %p291 = pneg %p120
      %p292 = pneg %p144
      %p293 = pneg %p141
      %p294 = pneg %p165
      %p295 = pneg %p162
      %p296 = pneg %p186
      %p297 = pneg %p183
      %p298 = pneg %p212
      %p299 = pneg %p209
      %p300 = scmp.lt.s32.totalorder %s24, 2
      %s301 = scalar_select %p300, %s24, 2
      %s302 = scalar_lea.vmem %s7, %s301
      %s303 = smul.u32 16, %s24
      %p304 = scmp.lt.s32.totalorder %s303, 47
      %s305 = scalar_select %p304, %s303, 47
      %p306 = scmp.lt.s32.totalorder %s25, 0
      %s307 = scalar_select %p306, %s25, 0
      %s308 = sadd.s32 %s307, %s305
      %s309 = smul.addr %s308, 4
      %s310 = scalar_lea.vmem %s0, %s309
      %s311 = smul.u32 16, %s24
      %p312 = scmp.lt.s32.totalorder %s25, 0
      %s313 = scalar_select %p312, %s25, 0
      %s314 = smul.addr %s313, 4
      %s315 = scalar_lea.vmem %s1, %s314
      %p316 = scmp.lt.s32.totalorder %s24, 2
      %s317 = scalar_select %p316, %s24, 2
      %s318 = scalar_lea.vmem %s7, %s317
      %p320 = scmp.eq.s32.totalorder %s25, 0
      // Predicated region
      $region49: #{fake_news_classifier_forward.1} parent=47 // pred_check
        %p321 = pneg %p320
      $region50: #{fake_news_classifier_forward.1} parent=47 // pred_check_branch
        %323 = sbr.rel (%p321) target = $region52
      $region51: #{fake_news_classifier_forward.1} parent=47 // pred_region
        %324 = vst [vmem:[#allocation2] sm:$0xff] 0.0
        %325 = vst [vmem:[#allocation2 + $0x8] sm:$0xff] 0.0
        %326 = vst [vmem:[#allocation2 + $0x10] sm:$0xff] 0.0
        %327 = vst [vmem:[#allocation2 + $0x18] sm:$0xff] 0.0
        %328 = vst [vmem:[#allocation2 + $0x20] sm:$0xff] 0.0
        %329 = vst [vmem:[#allocation2 + $0x28] sm:$0xff] 0.0
        %330 = vst [vmem:[#allocation2 + $0x30] sm:$0xff] 0.0
        %331 = vst [vmem:[#allocation2 + $0x38] sm:$0xff] 0.0
        %332 = vst [vmem:[#allocation2 + $0x40] sm:$0xff] 0.0
        %333 = vst [vmem:[#allocation2 + $0x48] sm:$0xff] 0.0
        %334 = vst [vmem:[#allocation2 + $0x50] sm:$0xff] 0.0
        %335 = vst [vmem:[#allocation2 + $0x58] sm:$0xff] 0.0
        %336 = vst [vmem:[#allocation2 + $0x60] sm:$0xff] 0.0
        %337 = vst [vmem:[#allocation2 + $0x68] sm:$0xff] 0.0
        %338 = vst [vmem:[#allocation2 + $0x70] sm:$0xff] 0.0
        %339 = vst [vmem:[#allocation2 + $0x78] sm:$0xff] 0.0
        %340 = vst [vmem:[#allocation2 + $0x80] sm:$0xff] 0.0
        %341 = vst [vmem:[#allocation2 + $0x88] sm:$0xff] 0.0
        %342 = vst [vmem:[#allocation2 + $0x90] sm:$0xff] 0.0
        %343 = vst [vmem:[#allocation2 + $0x98] sm:$0xff] 0.0
        %344 = vst [vmem:[#allocation2 + $0xa0] sm:$0xff] 0.0
        %345 = vst [vmem:[#allocation2 + $0xa8] sm:$0xff] 0.0
        %346 = vst [vmem:[#allocation2 + $0xb0] sm:$0xff] 0.0
        %347 = vst [vmem:[#allocation2 + $0xb8] sm:$0xff] 0.0
        %348 = vst [vmem:[#allocation2 + $0xc0] sm:$0xff] 0.0
        %349 = vst [vmem:[#allocation2 + $0xc8] sm:$0xff] 0.0
        %350 = vst [vmem:[#allocation2 + $0xd0] sm:$0xff] 0.0
        %351 = vst [vmem:[#allocation2 + $0xd8] sm:$0xff] 0.0
        %352 = vst [vmem:[#allocation2 + $0xe0] sm:$0xff] 0.0
        %353 = vst [vmem:[#allocation2 + $0xe8] sm:$0xff] 0.0
        %354 = vst [vmem:[#allocation2 + $0xf0] sm:$0xff] 0.0
        %355 = vst [vmem:[#allocation2 + $0xf8] sm:$0xff] 0.0
        %356 = vst [vmem:[#allocation2 + $0x100] sm:$0xff] 0.0
        %357 = vst [vmem:[#allocation2 + $0x108] sm:$0xff] 0.0
        %358 = vst [vmem:[#allocation2 + $0x110] sm:$0xff] 0.0
        %359 = vst [vmem:[#allocation2 + $0x118] sm:$0xff] 0.0
        %360 = vst [vmem:[#allocation2 + $0x120] sm:$0xff] 0.0
        %361 = vst [vmem:[#allocation2 + $0x128] sm:$0xff] 0.0
        %362 = vst [vmem:[#allocation2 + $0x130] sm:$0xff] 0.0
        %363 = vst [vmem:[#allocation2 + $0x138] sm:$0xff] 0.0
        %364 = vst [vmem:[#allocation2 + $0x140] sm:$0xff] 0.0
        %365 = vst [vmem:[#allocation2 + $0x148] sm:$0xff] 0.0
        %366 = vst [vmem:[#allocation2 + $0x150] sm:$0xff] 0.0
        %367 = vst [vmem:[#allocation2 + $0x158] sm:$0xff] 0.0
        %368 = vst [vmem:[#allocation2 + $0x160] sm:$0xff] 0.0
        %369 = vst [vmem:[#allocation2 + $0x168] sm:$0xff] 0.0
        %370 = vst [vmem:[#allocation2 + $0x170] sm:$0xff] 0.0
        %371 = vst [vmem:[#allocation2 + $0x178] sm:$0xff] 0.0
        %372 = vst [vmem:[#allocation2 + $0x180] sm:$0xff] 0.0
        %373 = vst [vmem:[#allocation2 + $0x188] sm:$0xff] 0.0
        %374 = vst [vmem:[#allocation2 + $0x190] sm:$0xff] 0.0
        %375 = vst [vmem:[#allocation2 + $0x198] sm:$0xff] 0.0
        %376 = vst [vmem:[#allocation2 + $0x1a0] sm:$0xff] 0.0
        %377 = vst [vmem:[#allocation2 + $0x1a8] sm:$0xff] 0.0
        %378 = vst [vmem:[#allocation2 + $0x1b0] sm:$0xff] 0.0
        %379 = vst [vmem:[#allocation2 + $0x1b8] sm:$0xff] 0.0
        %380 = vst [vmem:[#allocation2 + $0x1c0] sm:$0xff] 0.0
        %381 = vst [vmem:[#allocation2 + $0x1c8] sm:$0xff] 0.0
        %382 = vst [vmem:[#allocation2 + $0x1d0] sm:$0xff] 0.0
        %383 = vst [vmem:[#allocation2 + $0x1d8] sm:$0xff] 0.0
        %384 = vst [vmem:[#allocation2 + $0x1e0] sm:$0xff] 0.0
        %385 = vst [vmem:[#allocation2 + $0x1e8] sm:$0xff] 0.0
        %386 = vst [vmem:[#allocation2 + $0x1f0] sm:$0xff] 0.0
        %387 = vst [vmem:[#allocation2 + $0x1f8] sm:$0xff] 0.0
      $region52: #{fake_news_classifier_forward.1} parent=47 // pred_fallthru
        _
      %v388 = vld [vmem:[#allocation2] sm:$0xff]
      %v389 = vld [vmem:[#allocation2 + $0x8] sm:$0xff]
      %v390 = vld [vmem:[#allocation2 + $0x10] sm:$0xff]
      %v391 = vld [vmem:[#allocation2 + $0x18] sm:$0xff]
      %v392 = vld [vmem:[#allocation2 + $0x20] sm:$0xff]
      %v393 = vld [vmem:[#allocation2 + $0x28] sm:$0xff]
      %v394 = vld [vmem:[#allocation2 + $0x30] sm:$0xff]
      %v395 = vld [vmem:[#allocation2 + $0x38] sm:$0xff]
      %v396 = vld [vmem:[#allocation2 + $0x40] sm:$0xff]
      %v397 = vld [vmem:[#allocation2 + $0x48] sm:$0xff]
      %v398 = vld [vmem:[#allocation2 + $0x50] sm:$0xff]
      %v399 = vld [vmem:[#allocation2 + $0x58] sm:$0xff]
      %v400 = vld [vmem:[#allocation2 + $0x60] sm:$0xff]
      %v401 = vld [vmem:[#allocation2 + $0x68] sm:$0xff]
      %v402 = vld [vmem:[#allocation2 + $0x70] sm:$0xff]
      %v403 = vld [vmem:[#allocation2 + $0x78] sm:$0xff]
      %v404 = vld [vmem:[#allocation2 + $0x80] sm:$0xff]
      %v405 = vld [vmem:[#allocation2 + $0x88] sm:$0xff]
      %v406 = vld [vmem:[#allocation2 + $0x90] sm:$0xff]
      %v407 = vld [vmem:[#allocation2 + $0x98] sm:$0xff]
      %v408 = vld [vmem:[#allocation2 + $0xa0] sm:$0xff]
      %v409 = vld [vmem:[#allocation2 + $0xa8] sm:$0xff]
      %v410 = vld [vmem:[#allocation2 + $0xb0] sm:$0xff]
      %v411 = vld [vmem:[#allocation2 + $0xb8] sm:$0xff]
      %v412 = vld [vmem:[#allocation2 + $0xc0] sm:$0xff]
      %v413 = vld [vmem:[#allocation2 + $0xc8] sm:$0xff]
      %v414 = vld [vmem:[#allocation2 + $0xd0] sm:$0xff]
      %v415 = vld [vmem:[#allocation2 + $0xd8] sm:$0xff]
      %v416 = vld [vmem:[#allocation2 + $0xe0] sm:$0xff]
      %v417 = vld [vmem:[#allocation2 + $0xe8] sm:$0xff]
      %v418 = vld [vmem:[#allocation2 + $0xf0] sm:$0xff]
      %v419 = vld [vmem:[#allocation2 + $0xf8] sm:$0xff]
      %v420 = vld [vmem:[#allocation2 + $0x100] sm:$0xff]
      %v421 = vld [vmem:[#allocation2 + $0x108] sm:$0xff]
      %v422 = vld [vmem:[#allocation2 + $0x110] sm:$0xff]
      %v423 = vld [vmem:[#allocation2 + $0x118] sm:$0xff]
      %v424 = vld [vmem:[#allocation2 + $0x120] sm:$0xff]
      %v425 = vld [vmem:[#allocation2 + $0x128] sm:$0xff]
      %v426 = vld [vmem:[#allocation2 + $0x130] sm:$0xff]
      %v427 = vld [vmem:[#allocation2 + $0x138] sm:$0xff]
      %v428 = vld [vmem:[#allocation2 + $0x140] sm:$0xff]
      %v429 = vld [vmem:[#allocation2 + $0x148] sm:$0xff]
      %v430 = vld [vmem:[#allocation2 + $0x150] sm:$0xff]
      %v431 = vld [vmem:[#allocation2 + $0x158] sm:$0xff]
      %v432 = vld [vmem:[#allocation2 + $0x160] sm:$0xff]
      %v433 = vld [vmem:[#allocation2 + $0x168] sm:$0xff]
      %v434 = vld [vmem:[#allocation2 + $0x170] sm:$0xff]
      %v435 = vld [vmem:[#allocation2 + $0x178] sm:$0xff]
      %v436 = vld [vmem:[#allocation2 + $0x180] sm:$0xff]
      %v437 = vld [vmem:[#allocation2 + $0x188] sm:$0xff]
      %v438 = vld [vmem:[#allocation2 + $0x190] sm:$0xff]
      %v439 = vld [vmem:[#allocation2 + $0x198] sm:$0xff]
      %v440 = vld [vmem:[#allocation2 + $0x1a0] sm:$0xff]
      %v441 = vld [vmem:[#allocation2 + $0x1a8] sm:$0xff]
      %v442 = vld [vmem:[#allocation2 + $0x1b0] sm:$0xff]
      %v443 = vld [vmem:[#allocation2 + $0x1b8] sm:$0xff]
      %v444 = vld [vmem:[#allocation2 + $0x1c0] sm:$0xff]
      %v445 = vld [vmem:[#allocation2 + $0x1c8] sm:$0xff]
      %v446 = vld [vmem:[#allocation2 + $0x1d0] sm:$0xff]
      %v447 = vld [vmem:[#allocation2 + $0x1d8] sm:$0xff]
      %v448 = vld [vmem:[#allocation2 + $0x1e0] sm:$0xff]
      %v449 = vld [vmem:[#allocation2 + $0x1e8] sm:$0xff]
      %v450 = vld [vmem:[#allocation2 + $0x1f0] sm:$0xff]
      %v451 = vld [vmem:[#allocation2 + $0x1f8] sm:$0xff]
      %v452 = vld [vmem:[%s315] sm:$0xf]
      %v453 = vld [vmem:[%s315 + $0x4] sm:$0xf]
      %v454 = vld [vmem:[%s315 + $0x8] sm:$0xf]
      %v455 = vld [vmem:[%s315 + $0xc] sm:$0xf]
      %v456 = vld [vmem:[%s315 + $0x10] sm:$0xf]
      %v457 = vld [vmem:[%s315 + $0x14] sm:$0xf]
      %v458 = vld [vmem:[%s315 + $0x18] sm:$0xf]
      %v459 = vld [vmem:[%s315 + $0x1c] sm:$0xf]
      %v460 = vld [vmem:[%s315 + $0x20] sm:$0xf]
      %v461 = vld [vmem:[%s315 + $0x24] sm:$0xf]
      %v462 = vld [vmem:[%s315 + $0x28] sm:$0xf]
      %v463 = vld [vmem:[%s315 + $0x2c] sm:$0xf]
      %v464 = vld [vmem:[%s315 + $0x30] sm:$0xf]
      %v465 = vld [vmem:[%s315 + $0x34] sm:$0xf]
      %v466 = vld [vmem:[%s315 + $0x38] sm:$0xf]
      %v467 = vld [vmem:[%s315 + $0x3c] sm:$0xf]
      %v468 = vld [vmem:[%s315 + $0x40] sm:$0xf]
      %v469 = vld [vmem:[%s315 + $0x44] sm:$0xf]
      %v470 = vld [vmem:[%s315 + $0x48] sm:$0xf]
      %v471 = vld [vmem:[%s315 + $0x4c] sm:$0xf]
      %v472 = vld [vmem:[%s315 + $0x50] sm:$0xf]
      %v473 = vld [vmem:[%s315 + $0x54] sm:$0xf]
      %v474 = vld [vmem:[%s315 + $0x58] sm:$0xf]
      %v475 = vld [vmem:[%s315 + $0x5c] sm:$0xf]
      %v476 = vld [vmem:[%s315 + $0x60] sm:$0xf]
      %v477 = vld [vmem:[%s315 + $0x64] sm:$0xf]
      %v478 = vld [vmem:[%s315 + $0x68] sm:$0xf]
      %v479 = vld [vmem:[%s315 + $0x6c] sm:$0xf]
      %v480 = vld [vmem:[%s315 + $0x70] sm:$0xf]
      %v481 = vld [vmem:[%s315 + $0x74] sm:$0xf]
      %v482 = vld [vmem:[%s315 + $0x78] sm:$0xf]
      %v483 = vld [vmem:[%s315 + $0x7c] sm:$0xf]
      %v484 = vld [vmem:[%s315 + $0x80] sm:$0xf]
      %v485 = vld [vmem:[%s315 + $0x84] sm:$0xf]
      %v486 = vld [vmem:[%s315 + $0x88] sm:$0xf]
      %v487 = vld [vmem:[%s315 + $0x8c] sm:$0xf]
      %v488 = vld [vmem:[%s315 + $0x90] sm:$0xf]
      %v489 = vld [vmem:[%s315 + $0x94] sm:$0xf]
      %v490 = vld [vmem:[%s315 + $0x98] sm:$0xf]
      %v491 = vld [vmem:[%s315 + $0x9c] sm:$0xf]
      %v492 = vld [vmem:[%s315 + $0xa0] sm:$0xf]
      %v493 = vld [vmem:[%s315 + $0xa4] sm:$0xf]
      %v494 = vld [vmem:[%s315 + $0xa8] sm:$0xf]
      %v495 = vld [vmem:[%s315 + $0xac] sm:$0xf]
      %v496 = vld [vmem:[%s315 + $0xb0] sm:$0xf]
      %v497 = vld [vmem:[%s315 + $0xb4] sm:$0xf]
      %v498 = vld [vmem:[%s315 + $0xb8] sm:$0xf]
      %v499 = vld [vmem:[%s315 + $0xbc] sm:$0xf]
      %v500 = vld [vmem:[%s315 + $0xc0] sm:$0xf]
      %v501 = vld [vmem:[%s315 + $0xc4] sm:$0xf]
      %v502 = vld [vmem:[%s315 + $0xc8] sm:$0xf]
      %v503 = vld [vmem:[%s315 + $0xcc] sm:$0xf]
      %v504 = vld [vmem:[%s315 + $0xd0] sm:$0xf]
      %v505 = vld [vmem:[%s315 + $0xd4] sm:$0xf]
      %v506 = vld [vmem:[%s315 + $0xd8] sm:$0xf]
      %v507 = vld [vmem:[%s315 + $0xdc] sm:$0xf]
      %v508 = vld [vmem:[%s315 + $0xe0] sm:$0xf]
      %v509 = vld [vmem:[%s315 + $0xe4] sm:$0xf]
      %v510 = vld [vmem:[%s315 + $0xe8] sm:$0xf]
      %v511 = vld [vmem:[%s315 + $0xec] sm:$0xf]
      %v512 = vld [vmem:[%s315 + $0xf0] sm:$0xf]
      %v513 = vld [vmem:[%s315 + $0xf4] sm:$0xf]
      %v514 = vld [vmem:[%s315 + $0xf8] sm:$0xf]
      %v515 = vld [vmem:[%s315 + $0xfc] sm:$0xf]
      %v516 = vld [vmem:[%s310] sm:$0xf]
      %v517 = vld [vmem:[%s310 + $0x4] sm:$0xf]
      %v518 = vld [vmem:[%s310 + $0x8] sm:$0xf]
      %v519 = vld [vmem:[%s310 + $0xc] sm:$0xf]
      %v520 = vld [vmem:[%s310 + $0x10] sm:$0xf]
      %v521 = vld [vmem:[%s310 + $0x14] sm:$0xf]
      %v522 = vld [vmem:[%s310 + $0x18] sm:$0xf]
      %v523 = vld [vmem:[%s310 + $0x1c] sm:$0xf]
      %v524 = vld [vmem:[%s310 + $0x20] sm:$0xf]
      %v525 = vld [vmem:[%s310 + $0x24] sm:$0xf]
      %v526 = vld [vmem:[%s310 + $0x28] sm:$0xf]
      %v527 = vld [vmem:[%s310 + $0x2c] sm:$0xf]
      %v528 = vld [vmem:[%s310 + $0x30] sm:$0xf]
      %v529 = vld [vmem:[%s310 + $0x34] sm:$0xf]
      %v530 = vld [vmem:[%s310 + $0x38] sm:$0xf]
      %v531 = vld [vmem:[%s310 + $0x3c] sm:$0xf]
      %v596 = vunpack.c.l.b16 %v452
      %v597 = vunpack.c.l.b16 %v453
      %v598 = vunpack.c.l.b16 %v454
      %v599 = vunpack.c.l.b16 %v455
      %v600 = vunpack.c.l.b16 %v456
      %v601 = vunpack.c.l.b16 %v457
      %v602 = vunpack.c.l.b16 %v458
      %v603 = vunpack.c.l.b16 %v459
      %v604 = vunpack.c.l.b16 %v460
      %v605 = vunpack.c.l.b16 %v461
      %v606 = vunpack.c.l.b16 %v462
      %v607 = vunpack.c.l.b16 %v463
      %v608 = vunpack.c.l.b16 %v464
      %v609 = vunpack.c.l.b16 %v465
      %v610 = vunpack.c.l.b16 %v466
      %v611 = vunpack.c.l.b16 %v467
      %v612 = vunpack.c.l.b16 %v468
      %v613 = vunpack.c.l.b16 %v469
      %v614 = vunpack.c.l.b16 %v470
      %v615 = vunpack.c.l.b16 %v471
      %v616 = vunpack.c.l.b16 %v472
      %v617 = vunpack.c.l.b16 %v473
      %v618 = vunpack.c.l.b16 %v474
      %v619 = vunpack.c.l.b16 %v475
      %v620 = vunpack.c.l.b16 %v476
      %v621 = vunpack.c.l.b16 %v477
      %v622 = vunpack.c.l.b16 %v478
      %v623 = vunpack.c.l.b16 %v479
      %v624 = vunpack.c.l.b16 %v480
      %v625 = vunpack.c.l.b16 %v481
      %v626 = vunpack.c.l.b16 %v482
      %v627 = vunpack.c.l.b16 %v483
      %v628 = vunpack.c.l.b16 %v484
      %v629 = vunpack.c.l.b16 %v485
      %v630 = vunpack.c.l.b16 %v486
      %v631 = vunpack.c.l.b16 %v487
      %v632 = vunpack.c.l.b16 %v488
      %v633 = vunpack.c.l.b16 %v489
      %v634 = vunpack.c.l.b16 %v490
      %v635 = vunpack.c.l.b16 %v491
      %v636 = vunpack.c.l.b16 %v492
      %v637 = vunpack.c.l.b16 %v493
      %v638 = vunpack.c.l.b16 %v494
      %v639 = vunpack.c.l.b16 %v495
      %v640 = vunpack.c.l.b16 %v496
      %v641 = vunpack.c.l.b16 %v497
      %v642 = vunpack.c.l.b16 %v498
      %v643 = vunpack.c.l.b16 %v499
      %v644 = vunpack.c.l.b16 %v500
      %v645 = vunpack.c.l.b16 %v501
      %v646 = vunpack.c.l.b16 %v502
      %v647 = vunpack.c.l.b16 %v503
      %v648 = vunpack.c.l.b16 %v504
      %v649 = vunpack.c.l.b16 %v505
      %v650 = vunpack.c.l.b16 %v506
      %v651 = vunpack.c.l.b16 %v507
      %v652 = vunpack.c.l.b16 %v508
      %v653 = vunpack.c.l.b16 %v509
      %v654 = vunpack.c.l.b16 %v510
      %v655 = vunpack.c.l.b16 %v511
      %v656 = vunpack.c.l.b16 %v512
      %v657 = vunpack.c.l.b16 %v513
      %v658 = vunpack.c.l.b16 %v514
      %v659 = vunpack.c.l.b16 %v515
      %v660 = vpack.c.b16 %v597, %v596
      %v661 = vpack.c.b16 %v599, %v598
      %v662 = vpack.c.b16 %v601, %v600
      %v663 = vpack.c.b16 %v603, %v602
      %v664 = vpack.c.b16 %v605, %v604
      %v665 = vpack.c.b16 %v607, %v606
      %v666 = vpack.c.b16 %v609, %v608
      %v667 = vpack.c.b16 %v611, %v610
      %v668 = vpack.c.b16 %v613, %v612
      %v669 = vpack.c.b16 %v615, %v614
      %v670 = vpack.c.b16 %v617, %v616
      %v671 = vpack.c.b16 %v619, %v618
      %v672 = vpack.c.b16 %v621, %v620
      %v673 = vpack.c.b16 %v623, %v622
      %v674 = vpack.c.b16 %v625, %v624
      %v675 = vpack.c.b16 %v627, %v626
      %v676 = vpack.c.b16 %v629, %v628
      %v677 = vpack.c.b16 %v631, %v630
      %v678 = vpack.c.b16 %v633, %v632
      %v679 = vpack.c.b16 %v635, %v634
      %v680 = vpack.c.b16 %v637, %v636
      %v681 = vpack.c.b16 %v639, %v638
      %v682 = vpack.c.b16 %v641, %v640
      %v683 = vpack.c.b16 %v643, %v642
      %v684 = vpack.c.b16 %v645, %v644
      %v685 = vpack.c.b16 %v647, %v646
      %v686 = vpack.c.b16 %v649, %v648
      %v687 = vpack.c.b16 %v651, %v650
      %v688 = vpack.c.b16 %v653, %v652
      %v689 = vpack.c.b16 %v655, %v654
      %v690 = vpack.c.b16 %v657, %v656
      %v691 = vpack.c.b16 %v659, %v658
      %v708 = vunpack.c.l.b16 %v516
      %v709 = vunpack.c.l.b16 %v517
      %v710 = vunpack.c.l.b16 %v518
      %v711 = vunpack.c.l.b16 %v519
      %v712 = vunpack.c.l.b16 %v520
      %v713 = vunpack.c.l.b16 %v521
      %v714 = vunpack.c.l.b16 %v522
      %v715 = vunpack.c.l.b16 %v523
      %v716 = vunpack.c.l.b16 %v524
      %v717 = vunpack.c.l.b16 %v525
      %v718 = vunpack.c.l.b16 %v526
      %v719 = vunpack.c.l.b16 %v527
      %v720 = vunpack.c.l.b16 %v528
      %v721 = vunpack.c.l.b16 %v529
      %v722 = vunpack.c.l.b16 %v530
      %v723 = vunpack.c.l.b16 %v531
      %v724 = vpack.c.b16 %v709, %v708
      %v725 = vpack.c.b16 %v711, %v710
      %v726 = vpack.c.b16 %v713, %v712
      %v727 = vpack.c.b16 %v715, %v714
      %v728 = vpack.c.b16 %v717, %v716
      %v729 = vpack.c.b16 %v719, %v718
      %v730 = vpack.c.b16 %v721, %v720
      %v731 = vpack.c.b16 %v723, %v722
      %vm732 = vcmask 523264
      %v734 = vsel %vm732, %v660, 0
      %v737 = vsel %vm732, %v661, 0
      %v740 = vsel %vm732, %v662, 0
      %v743 = vsel %vm732, %v663, 0
      %v746 = vsel %vm732, %v664, 0
      %v749 = vsel %vm732, %v665, 0
      %v752 = vsel %vm732, %v666, 0
      %v755 = vsel %vm732, %v667, 0
      %v758 = vsel %vm732, %v668, 0
      %v761 = vsel %vm732, %v669, 0
      %v764 = vsel %vm732, %v670, 0
      %v767 = vsel %vm732, %v671, 0
      %v770 = vsel %vm732, %v672, 0
      %v773 = vsel %vm732, %v673, 0
      %v776 = vsel %vm732, %v674, 0
      %v779 = vsel %vm732, %v675, 0
      %v782 = vsel %vm732, %v676, 0
      %v785 = vsel %vm732, %v677, 0
      %v788 = vsel %vm732, %v678, 0
      %v791 = vsel %vm732, %v679, 0
      %v794 = vsel %vm732, %v680, 0
      %v797 = vsel %vm732, %v681, 0
      %v800 = vsel %vm732, %v682, 0
      %v803 = vsel %vm732, %v683, 0
      %v806 = vsel %vm732, %v684, 0
      %v809 = vsel %vm732, %v685, 0
      %v812 = vsel %vm732, %v686, 0
      %v815 = vsel %vm732, %v687, 0
      %v818 = vsel %vm732, %v688, 0
      %v821 = vsel %vm732, %v689, 0
      %v824 = vsel %vm732, %v690, 0
      %v827 = vsel %vm732, %v691, 0
      %v830 = vsel %vm732, %v724, 0
      %v833 = vsel %vm732, %v725, 0
      %v836 = vsel %vm732, %v726, 0
      %v839 = vsel %vm732, %v727, 0
      %v842 = vsel %vm732, %v728, 0
      %v845 = vsel %vm732, %v729, 0
      %v848 = vsel %vm732, %v730, 0
      %v851 = vsel %vm732, %v731, 0
      %853 = vmatprep.subr.bf16.mxu0 0
      %854 = vmatpush1.bf16.xpose.msra.mxu0 %v851
      %855 = vmatprep.subr.bf16.mxu0 0
      %856 = vmatpush1.bf16.xpose.msra.mxu0 %v848
      %857 = vmatprep.subr.bf16.mxu0 0
      %858 = vmatpush1.bf16.xpose.msra.mxu0 %v845
      %859 = vmatprep.subr.bf16.mxu0 0
      %860 = vmatpush1.bf16.xpose.msra.mxu0 %v842
      %861 = vmatprep.subr.bf16.mxu0 0
      %862 = vmatpush1.bf16.xpose.msra.mxu0 %v839
      %863 = vmatprep.subr.bf16.mxu0 0
      %864 = vmatpush1.bf16.xpose.msra.mxu0 %v836
      %865 = vmatprep.subr.bf16.mxu0 0
      %866 = vmatpush1.bf16.xpose.msra.mxu0 %v833
      %867 = vmatprep.subr.bf16.mxu0 0
      %868 = vmatpush1.bf16.xpose.msra.mxu0 %v830
      %869 = vmatprep.subr.bf16.mxu0 0
      %870 = vmatpush2.bf16.xpose.msra.mxu0 0
      %871 = vmatprep.subr.bf16.mxu0 0
      %872 = vmatpush2.bf16.xpose.msra.mxu0 0
      %873 = vmatprep.subr.bf16.mxu0 0
      %874 = vmatpush2.bf16.xpose.msra.mxu0 0
      %875 = vmatprep.subr.bf16.mxu0 0
      %876 = vmatpush2.bf16.xpose.msra.mxu0 0
      %877 = vmatprep.subr.bf16.mxu0 0
      %878 = vmatpush2.bf16.xpose.msra.mxu0 0
      %879 = vmatprep.subr.bf16.mxu0 0
      %880 = vmatpush2.bf16.xpose.msra.mxu0 0
      %881 = vmatprep.subr.bf16.mxu0 0
      %882 = vmatpush2.bf16.xpose.msra.mxu0 0
      %883 = vmatprep.subr.bf16.mxu0 0
      %884 = vmatpush2.bf16.xpose.msra.mxu0 0
      %885 = vmatprep.mubr.bf16.mxu0 0
      %886 = vmatmul.mubr.bf16.gmra.mxu0 %v734
      %v887 = vpop.f32.mrf.mxu0
      %v888 = vadd.f32 0.0, %v887
      %v889 = vpop.f32.mrf.mxu0
      %v890 = vpop.f32.mrf.mxu0
      %v891 = vadd.f32 0.0, %v890
      %v892 = vpop.f32.mrf.mxu0
      %893 = vmatprep.mubr.bf16.mxu0 0
      %894 = vmatmul.mubr.bf16.gmra.mxu0 %v737
      %v895 = vpop.f32.mrf.mxu0
      %v896 = vadd.f32 0.0, %v895
      %v897 = vpop.f32.mrf.mxu0
      %v898 = vpop.f32.mrf.mxu0
      %v899 = vadd.f32 0.0, %v898
      %v900 = vpop.f32.mrf.mxu0
      %901 = vmatprep.mubr.bf16.mxu0 0
      %902 = vmatmul.mubr.bf16.gmra.mxu0 %v740
      %v903 = vpop.f32.mrf.mxu0
      %v904 = vadd.f32 0.0, %v903
      %v905 = vpop.f32.mrf.mxu0
      %v906 = vpop.f32.mrf.mxu0
      %v907 = vadd.f32 0.0, %v906
      %v908 = vpop.f32.mrf.mxu0
      %909 = vmatprep.mubr.bf16.mxu0 0
      %910 = vmatmul.mubr.bf16.gmra.mxu0 %v743
      %v911 = vpop.f32.mrf.mxu0
      %v912 = vadd.f32 0.0, %v911
      %v913 = vpop.f32.mrf.mxu0
      %v914 = vpop.f32.mrf.mxu0
      %v915 = vadd.f32 0.0, %v914
      %v916 = vpop.f32.mrf.mxu0
      %917 = vmatprep.mubr.bf16.mxu0 0
      %918 = vmatmul.mubr.bf16.gmra.mxu0 %v746
      %v919 = vpop.f32.mrf.mxu0
      %v920 = vadd.f32 0.0, %v919
      %v921 = vpop.f32.mrf.mxu0
      %v922 = vpop.f32.mrf.mxu0
      %v923 = vadd.f32 0.0, %v922
      %v924 = vpop.f32.mrf.mxu0
      %925 = vmatprep.mubr.bf16.mxu0 0
      %926 = vmatmul.mubr.bf16.gmra.mxu0 %v749
      %v927 = vpop.f32.mrf.mxu0
      %v928 = vadd.f32 0.0, %v927
      %v929 = vpop.f32.mrf.mxu0
      %v930 = vpop.f32.mrf.mxu0
      %v931 = vadd.f32 0.0, %v930
      %v932 = vpop.f32.mrf.mxu0
      %933 = vmatprep.mubr.bf16.mxu0 0
      %934 = vmatmul.mubr.bf16.gmra.mxu0 %v752
      %v935 = vpop.f32.mrf.mxu0
      %v936 = vadd.f32 0.0, %v935
      %v937 = vpop.f32.mrf.mxu0
      %v938 = vpop.f32.mrf.mxu0
      %v939 = vadd.f32 0.0, %v938
      %v940 = vpop.f32.mrf.mxu0
      %941 = vmatprep.mubr.bf16.mxu0 0
      %942 = vmatmul.mubr.bf16.gmra.mxu0 %v755
      %v943 = vpop.f32.mrf.mxu0
      %v944 = vadd.f32 0.0, %v943
      %v945 = vpop.f32.mrf.mxu0
      %v946 = vpop.f32.mrf.mxu0
      %v947 = vadd.f32 0.0, %v946
      %v948 = vpop.f32.mrf.mxu0
      %949 = vmatprep.mubr.bf16.mxu0 0
      %950 = vmatmul.mubr.bf16.gmra.mxu0 %v758
      %v951 = vpop.f32.mrf.mxu0
      %v952 = vadd.f32 0.0, %v951
      %v953 = vpop.f32.mrf.mxu0
      %v954 = vpop.f32.mrf.mxu0
      %v955 = vadd.f32 0.0, %v954
      %v956 = vpop.f32.mrf.mxu0
      %957 = vmatprep.mubr.bf16.mxu0 0
      %958 = vmatmul.mubr.bf16.gmra.mxu0 %v761
      %v959 = vpop.f32.mrf.mxu0
      %v960 = vadd.f32 0.0, %v959
      %v961 = vpop.f32.mrf.mxu0
      %v962 = vpop.f32.mrf.mxu0
      %v963 = vadd.f32 0.0, %v962
      %v964 = vpop.f32.mrf.mxu0
      %965 = vmatprep.mubr.bf16.mxu0 0
      %966 = vmatmul.mubr.bf16.gmra.mxu0 %v764
      %v967 = vpop.f32.mrf.mxu0
      %v968 = vadd.f32 0.0, %v967
      %v969 = vpop.f32.mrf.mxu0
      %v970 = vpop.f32.mrf.mxu0
      %v971 = vadd.f32 0.0, %v970
      %v972 = vpop.f32.mrf.mxu0
      %973 = vmatprep.mubr.bf16.mxu0 0
      %974 = vmatmul.mubr.bf16.gmra.mxu0 %v767
      %v975 = vpop.f32.mrf.mxu0
      %v976 = vadd.f32 0.0, %v975
      %v977 = vpop.f32.mrf.mxu0
      %v978 = vpop.f32.mrf.mxu0
      %v979 = vadd.f32 0.0, %v978
      %v980 = vpop.f32.mrf.mxu0
      %981 = vmatprep.mubr.bf16.mxu0 0
      %982 = vmatmul.mubr.bf16.gmra.mxu0 %v770
      %v983 = vpop.f32.mrf.mxu0
      %v984 = vadd.f32 0.0, %v983
      %v985 = vpop.f32.mrf.mxu0
      %v986 = vpop.f32.mrf.mxu0
      %v987 = vadd.f32 0.0, %v986
      %v988 = vpop.f32.mrf.mxu0
      %989 = vmatprep.mubr.bf16.mxu0 0
      %990 = vmatmul.mubr.bf16.gmra.mxu0 %v773
      %v991 = vpop.f32.mrf.mxu0
      %v992 = vadd.f32 0.0, %v991
      %v993 = vpop.f32.mrf.mxu0
      %v994 = vpop.f32.mrf.mxu0
      %v995 = vadd.f32 0.0, %v994
      %v996 = vpop.f32.mrf.mxu0
      %997 = vmatprep.mubr.bf16.mxu0 0
      %998 = vmatmul.mubr.bf16.gmra.mxu0 %v776
      %v999 = vpop.f32.mrf.mxu0
      %v1000 = vadd.f32 0.0, %v999
      %v1001 = vpop.f32.mrf.mxu0
      %v1002 = vpop.f32.mrf.mxu0
      %v1003 = vadd.f32 0.0, %v1002
      %v1004 = vpop.f32.mrf.mxu0
      %1005 = vmatprep.mubr.bf16.mxu0 0
      %1006 = vmatmul.mubr.bf16.gmra.mxu0 %v779
      %v1007 = vpop.f32.mrf.mxu0
      %v1008 = vadd.f32 0.0, %v1007
      %v1009 = vpop.f32.mrf.mxu0
      %v1010 = vpop.f32.mrf.mxu0
      %v1011 = vadd.f32 0.0, %v1010
      %v1012 = vpop.f32.mrf.mxu0
      %1013 = vmatprep.mubr.bf16.mxu0 0
      %1014 = vmatmul.mubr.bf16.gmra.mxu0 %v782
      %v1015 = vpop.f32.mrf.mxu0
      %v1016 = vadd.f32 0.0, %v1015
      %v1017 = vpop.f32.mrf.mxu0
      %v1018 = vpop.f32.mrf.mxu0
      %v1019 = vadd.f32 0.0, %v1018
      %v1020 = vpop.f32.mrf.mxu0
      %1021 = vmatprep.mubr.bf16.mxu0 0
      %1022 = vmatmul.mubr.bf16.gmra.mxu0 %v785
      %v1023 = vpop.f32.mrf.mxu0
      %v1024 = vadd.f32 0.0, %v1023
      %v1025 = vpop.f32.mrf.mxu0
      %v1026 = vpop.f32.mrf.mxu0
      %v1027 = vadd.f32 0.0, %v1026
      %v1028 = vpop.f32.mrf.mxu0
      %1029 = vmatprep.mubr.bf16.mxu0 0
      %1030 = vmatmul.mubr.bf16.gmra.mxu0 %v788
      %v1031 = vpop.f32.mrf.mxu0
      %v1032 = vadd.f32 0.0, %v1031
      %v1033 = vpop.f32.mrf.mxu0
      %v1034 = vpop.f32.mrf.mxu0
      %v1035 = vadd.f32 0.0, %v1034
      %v1036 = vpop.f32.mrf.mxu0
      %1037 = vmatprep.mubr.bf16.mxu0 0
      %1038 = vmatmul.mubr.bf16.gmra.mxu0 %v791
      %v1039 = vpop.f32.mrf.mxu0
      %v1040 = vadd.f32 0.0, %v1039
      %v1041 = vpop.f32.mrf.mxu0
      %v1042 = vpop.f32.mrf.mxu0
      %v1043 = vadd.f32 0.0, %v1042
      %v1044 = vpop.f32.mrf.mxu0
      %1045 = vmatprep.mubr.bf16.mxu0 0
      %1046 = vmatmul.mubr.bf16.gmra.mxu0 %v794
      %v1047 = vpop.f32.mrf.mxu0
      %v1048 = vadd.f32 0.0, %v1047
      %v1049 = vpop.f32.mrf.mxu0
      %v1050 = vpop.f32.mrf.mxu0
      %v1051 = vadd.f32 0.0, %v1050
      %v1052 = vpop.f32.mrf.mxu0
      %1053 = vmatprep.mubr.bf16.mxu0 0
      %1054 = vmatmul.mubr.bf16.gmra.mxu0 %v797
      %v1055 = vpop.f32.mrf.mxu0
      %v1056 = vadd.f32 0.0, %v1055
      %v1057 = vpop.f32.mrf.mxu0
      %v1058 = vpop.f32.mrf.mxu0
      %v1059 = vadd.f32 0.0, %v1058
      %v1060 = vpop.f32.mrf.mxu0
      %1061 = vmatprep.mubr.bf16.mxu0 0
      %1062 = vmatmul.mubr.bf16.gmra.mxu0 %v800
      %v1063 = vpop.f32.mrf.mxu0
      %v1064 = vadd.f32 0.0, %v1063
      %v1065 = vpop.f32.mrf.mxu0
      %v1066 = vpop.f32.mrf.mxu0
      %v1067 = vadd.f32 0.0, %v1066
      %v1068 = vpop.f32.mrf.mxu0
      %1069 = vmatprep.mubr.bf16.mxu0 0
      %1070 = vmatmul.mubr.bf16.gmra.mxu0 %v803
      %v1071 = vpop.f32.mrf.mxu0
      %v1072 = vadd.f32 0.0, %v1071
      %v1073 = vpop.f32.mrf.mxu0
      %v1074 = vpop.f32.mrf.mxu0
      %v1075 = vadd.f32 0.0, %v1074
      %v1076 = vpop.f32.mrf.mxu0
      %1077 = vmatprep.mubr.bf16.mxu0 0
      %1078 = vmatmul.mubr.bf16.gmra.mxu0 %v806
      %v1079 = vpop.f32.mrf.mxu0
      %v1080 = vadd.f32 0.0, %v1079
      %v1081 = vpop.f32.mrf.mxu0
      %v1082 = vpop.f32.mrf.mxu0
      %v1083 = vadd.f32 0.0, %v1082
      %v1084 = vpop.f32.mrf.mxu0
      %1085 = vmatprep.mubr.bf16.mxu0 0
      %1086 = vmatmul.mubr.bf16.gmra.mxu0 %v809
      %v1087 = vpop.f32.mrf.mxu0
      %v1088 = vadd.f32 0.0, %v1087
      %v1089 = vpop.f32.mrf.mxu0
      %v1090 = vpop.f32.mrf.mxu0
      %v1091 = vadd.f32 0.0, %v1090
      %v1092 = vpop.f32.mrf.mxu0
      %1093 = vmatprep.mubr.bf16.mxu0 0
      %1094 = vmatmul.mubr.bf16.gmra.mxu0 %v812
      %v1095 = vpop.f32.mrf.mxu0
      %v1096 = vadd.f32 0.0, %v1095
      %v1097 = vpop.f32.mrf.mxu0
      %v1098 = vpop.f32.mrf.mxu0
      %v1099 = vadd.f32 0.0, %v1098
      %v1100 = vpop.f32.mrf.mxu0
      %1101 = vmatprep.mubr.bf16.mxu0 0
      %1102 = vmatmul.mubr.bf16.gmra.mxu0 %v815
      %v1103 = vpop.f32.mrf.mxu0
      %v1104 = vadd.f32 0.0, %v1103
      %v1105 = vpop.f32.mrf.mxu0
      %v1106 = vpop.f32.mrf.mxu0
      %v1107 = vadd.f32 0.0, %v1106
      %v1108 = vpop.f32.mrf.mxu0
      %1109 = vmatprep.mubr.bf16.mxu0 0
      %1110 = vmatmul.mubr.bf16.gmra.mxu0 %v818
      %v1111 = vpop.f32.mrf.mxu0
      %v1112 = vadd.f32 0.0, %v1111
      %v1113 = vpop.f32.mrf.mxu0
      %v1114 = vpop.f32.mrf.mxu0
      %v1115 = vadd.f32 0.0, %v1114
      %v1116 = vpop.f32.mrf.mxu0
      %1117 = vmatprep.mubr.bf16.mxu0 0
      %1118 = vmatmul.mubr.bf16.gmra.mxu0 %v821
      %v1119 = vpop.f32.mrf.mxu0
      %v1120 = vadd.f32 0.0, %v1119
      %v1121 = vpop.f32.mrf.mxu0
      %v1122 = vpop.f32.mrf.mxu0
      %v1123 = vadd.f32 0.0, %v1122
      %v1124 = vpop.f32.mrf.mxu0
      %1125 = vmatprep.mubr.bf16.mxu0 0
      %1126 = vmatmul.mubr.bf16.gmra.mxu0 %v824
      %v1127 = vpop.f32.mrf.mxu0
      %v1128 = vadd.f32 0.0, %v1127
      %v1129 = vpop.f32.mrf.mxu0
      %v1130 = vpop.f32.mrf.mxu0
      %v1131 = vadd.f32 0.0, %v1130
      %v1132 = vpop.f32.mrf.mxu0
      %1133 = vmatprep.mubr.bf16.mxu0 0
      %1134 = vmatmul.mubr.bf16.gmra.mxu0 %v827
      %v1135 = vpop.f32.mrf.mxu0
      %v1136 = vadd.f32 0.0, %v1135
      %v1137 = vpop.f32.mrf.mxu0
      %v1138 = vpop.f32.mrf.mxu0
      %v1139 = vadd.f32 0.0, %v1138
      %v1140 = vpop.f32.mrf.mxu0
      %1141 = vdwg.mxu0
      %v1142 = vadd.f32 %v388, %v888
      %v1143 = vadd.f32 %v389, %v891
      %v1144 = vadd.f32 %v390, %v896
      %v1145 = vadd.f32 %v391, %v899
      %v1146 = vadd.f32 %v392, %v904
      %v1147 = vadd.f32 %v393, %v907
      %v1148 = vadd.f32 %v394, %v912
      %v1149 = vadd.f32 %v395, %v915
      %v1150 = vadd.f32 %v396, %v920
      %v1151 = vadd.f32 %v397, %v923
      %v1152 = vadd.f32 %v398, %v928
      %v1153 = vadd.f32 %v399, %v931
      %v1154 = vadd.f32 %v400, %v936
      %v1155 = vadd.f32 %v401, %v939
      %v1156 = vadd.f32 %v402, %v944
      %v1157 = vadd.f32 %v403, %v947
      %v1158 = vadd.f32 %v404, %v952
      %v1159 = vadd.f32 %v405, %v955
      %v1160 = vadd.f32 %v406, %v960
      %v1161 = vadd.f32 %v407, %v963
      %v1162 = vadd.f32 %v408, %v968
      %v1163 = vadd.f32 %v409, %v971
      %v1164 = vadd.f32 %v410, %v976
      %v1165 = vadd.f32 %v411, %v979
      %v1166 = vadd.f32 %v412, %v984
      %v1167 = vadd.f32 %v413, %v987
      %v1168 = vadd.f32 %v414, %v992
      %v1169 = vadd.f32 %v415, %v995
      %v1170 = vadd.f32 %v416, %v1000
      %v1171 = vadd.f32 %v417, %v1003
      %v1172 = vadd.f32 %v418, %v1008
      %v1173 = vadd.f32 %v419, %v1011
      %v1174 = vadd.f32 %v420, %v1016
      %v1175 = vadd.f32 %v421, %v1019
      %v1176 = vadd.f32 %v422, %v1024
      %v1177 = vadd.f32 %v423, %v1027
      %v1178 = vadd.f32 %v424, %v1032
      %v1179 = vadd.f32 %v425, %v1035
      %v1180 = vadd.f32 %v426, %v1040
      %v1181 = vadd.f32 %v427, %v1043
      %v1182 = vadd.f32 %v428, %v1048
      %v1183 = vadd.f32 %v429, %v1051
      %v1184 = vadd.f32 %v430, %v1056
      %v1185 = vadd.f32 %v431, %v1059
      %v1186 = vadd.f32 %v432, %v1064
      %v1187 = vadd.f32 %v433, %v1067
      %v1188 = vadd.f32 %v434, %v1072
      %v1189 = vadd.f32 %v435, %v1075
      %v1190 = vadd.f32 %v436, %v1080
      %v1191 = vadd.f32 %v437, %v1083
      %v1192 = vadd.f32 %v438, %v1088
      %v1193 = vadd.f32 %v439, %v1091
      %v1194 = vadd.f32 %v440, %v1096
      %v1195 = vadd.f32 %v441, %v1099
      %v1196 = vadd.f32 %v442, %v1104
      %v1197 = vadd.f32 %v443, %v1107
      %v1198 = vadd.f32 %v444, %v1112
      %v1199 = vadd.f32 %v445, %v1115
      %v1200 = vadd.f32 %v446, %v1120
      %v1201 = vadd.f32 %v447, %v1123
      %v1202 = vadd.f32 %v448, %v1128
      %v1203 = vadd.f32 %v449, %v1131
      %v1204 = vadd.f32 %v450, %v1136
      %v1205 = vadd.f32 %v451, %v1139
      %1206 = vst [vmem:[#allocation2] sm:$0xff] %v1142
      %1207 = vst [vmem:[#allocation2 + $0x8] sm:$0xff] %v1143
      %1208 = vst [vmem:[#allocation2 + $0x10] sm:$0xff] %v1144
      %1209 = vst [vmem:[#allocation2 + $0x18] sm:$0xff] %v1145
      %1210 = vst [vmem:[#allocation2 + $0x20] sm:$0xff] %v1146
      %1211 = vst [vmem:[#allocation2 + $0x28] sm:$0xff] %v1147
      %1212 = vst [vmem:[#allocation2 + $0x30] sm:$0xff] %v1148
      %1213 = vst [vmem:[#allocation2 + $0x38] sm:$0xff] %v1149
      %1214 = vst [vmem:[#allocation2 + $0x40] sm:$0xff] %v1150
      %1215 = vst [vmem:[#allocation2 + $0x48] sm:$0xff] %v1151
      %1216 = vst [vmem:[#allocation2 + $0x50] sm:$0xff] %v1152
      %1217 = vst [vmem:[#allocation2 + $0x58] sm:$0xff] %v1153
      %1218 = vst [vmem:[#allocation2 + $0x60] sm:$0xff] %v1154
      %1219 = vst [vmem:[#allocation2 + $0x68] sm:$0xff] %v1155
      %1220 = vst [vmem:[#allocation2 + $0x70] sm:$0xff] %v1156
      %1221 = vst [vmem:[#allocation2 + $0x78] sm:$0xff] %v1157
      %1222 = vst [vmem:[#allocation2 + $0x80] sm:$0xff] %v1158
      %1223 = vst [vmem:[#allocation2 + $0x88] sm:$0xff] %v1159
      %1224 = vst [vmem:[#allocation2 + $0x90] sm:$0xff] %v1160
      %1225 = vst [vmem:[#allocation2 + $0x98] sm:$0xff] %v1161
      %1226 = vst [vmem:[#allocation2 + $0xa0] sm:$0xff] %v1162
      %1227 = vst [vmem:[#allocation2 + $0xa8] sm:$0xff] %v1163
      %1228 = vst [vmem:[#allocation2 + $0xb0] sm:$0xff] %v1164
      %1229 = vst [vmem:[#allocation2 + $0xb8] sm:$0xff] %v1165
      %1230 = vst [vmem:[#allocation2 + $0xc0] sm:$0xff] %v1166
      %1231 = vst [vmem:[#allocation2 + $0xc8] sm:$0xff] %v1167
      %1232 = vst [vmem:[#allocation2 + $0xd0] sm:$0xff] %v1168
      %1233 = vst [vmem:[#allocation2 + $0xd8] sm:$0xff] %v1169
      %1234 = vst [vmem:[#allocation2 + $0xe0] sm:$0xff] %v1170
      %1235 = vst [vmem:[#allocation2 + $0xe8] sm:$0xff] %v1171
      %1236 = vst [vmem:[#allocation2 + $0xf0] sm:$0xff] %v1172
      %1237 = vst [vmem:[#allocation2 + $0xf8] sm:$0xff] %v1173
      %1238 = vst [vmem:[#allocation2 + $0x100] sm:$0xff] %v1174
      %1239 = vst [vmem:[#allocation2 + $0x108] sm:$0xff] %v1175
      %1240 = vst [vmem:[#allocation2 + $0x110] sm:$0xff] %v1176
      %1241 = vst [vmem:[#allocation2 + $0x118] sm:$0xff] %v1177
      %1242 = vst [vmem:[#allocation2 + $0x120] sm:$0xff] %v1178
      %1243 = vst [vmem:[#allocation2 + $0x128] sm:$0xff] %v1179
      %1244 = vst [vmem:[#allocation2 + $0x130] sm:$0xff] %v1180
      %1245 = vst [vmem:[#allocation2 + $0x138] sm:$0xff] %v1181
      %1246 = vst [vmem:[#allocation2 + $0x140] sm:$0xff] %v1182
      %1247 = vst [vmem:[#allocation2 + $0x148] sm:$0xff] %v1183
      %1248 = vst [vmem:[#allocation2 + $0x150] sm:$0xff] %v1184
      %1249 = vst [vmem:[#allocation2 + $0x158] sm:$0xff] %v1185
      %1250 = vst [vmem:[#allocation2 + $0x160] sm:$0xff] %v1186
      %1251 = vst [vmem:[#allocation2 + $0x168] sm:$0xff] %v1187
      %1252 = vst [vmem:[#allocation2 + $0x170] sm:$0xff] %v1188
      %1253 = vst [vmem:[#allocation2 + $0x178] sm:$0xff] %v1189
      %1254 = vst [vmem:[#allocation2 + $0x180] sm:$0xff] %v1190
      %1255 = vst [vmem:[#allocation2 + $0x188] sm:$0xff] %v1191
      %1256 = vst [vmem:[#allocation2 + $0x190] sm:$0xff] %v1192
      %1257 = vst [vmem:[#allocation2 + $0x198] sm:$0xff] %v1193
      %1258 = vst [vmem:[#allocation2 + $0x1a0] sm:$0xff] %v1194
      %1259 = vst [vmem:[#allocation2 + $0x1a8] sm:$0xff] %v1195
      %1260 = vst [vmem:[#allocation2 + $0x1b0] sm:$0xff] %v1196
      %1261 = vst [vmem:[#allocation2 + $0x1b8] sm:$0xff] %v1197
      %1262 = vst [vmem:[#allocation2 + $0x1c0] sm:$0xff] %v1198
      %1263 = vst [vmem:[#allocation2 + $0x1c8] sm:$0xff] %v1199
      %1264 = vst [vmem:[#allocation2 + $0x1d0] sm:$0xff] %v1200
      %1265 = vst [vmem:[#allocation2 + $0x1d8] sm:$0xff] %v1201
      %1266 = vst [vmem:[#allocation2 + $0x1e0] sm:$0xff] %v1202
      %1267 = vst [vmem:[#allocation2 + $0x1e8] sm:$0xff] %v1203
      %1268 = vst [vmem:[#allocation2 + $0x1f0] sm:$0xff] %v1204
      %1269 = vst [vmem:[#allocation2 + $0x1f8] sm:$0xff] %v1205
      // Predicated region
      $region53: #{fake_news_classifier_forward.1} parent=47 // pred_check
        %p1270 = pneg %p320
      $region54: #{fake_news_classifier_forward.1} parent=47 // pred_check_branch
        %1272 = sbr.rel (%p1270) target = $region56
      $region55: #{fake_news_classifier_forward.1} parent=47 // pred_region
        %v1273 = vld [vmem:[#allocation2] sm:$0xff]
        %v1274 = vld [vmem:[#allocation2 + $0x8] sm:$0xff]
        %v1275 = vld [vmem:[#allocation2 + $0x10] sm:$0xff]
        %v1276 = vld [vmem:[#allocation2 + $0x18] sm:$0xff]
        %v1277 = vld [vmem:[#allocation2 + $0x20] sm:$0xff]
        %v1278 = vld [vmem:[#allocation2 + $0x28] sm:$0xff]
        %v1279 = vld [vmem:[#allocation2 + $0x30] sm:$0xff]
        %v1280 = vld [vmem:[#allocation2 + $0x38] sm:$0xff]
        %v1281 = vld [vmem:[#allocation2 + $0x40] sm:$0xff]
        %v1282 = vld [vmem:[#allocation2 + $0x48] sm:$0xff]
        %v1283 = vld [vmem:[#allocation2 + $0x50] sm:$0xff]
        %v1284 = vld [vmem:[#allocation2 + $0x58] sm:$0xff]
        %v1285 = vld [vmem:[#allocation2 + $0x60] sm:$0xff]
        %v1286 = vld [vmem:[#allocation2 + $0x68] sm:$0xff]
        %v1287 = vld [vmem:[#allocation2 + $0x70] sm:$0xff]
        %v1288 = vld [vmem:[#allocation2 + $0x78] sm:$0xff]
        %v1289 = vld [vmem:[#allocation2 + $0x80] sm:$0xff]
        %v1290 = vld [vmem:[#allocation2 + $0x88] sm:$0xff]
        %v1291 = vld [vmem:[#allocation2 + $0x90] sm:$0xff]
        %v1292 = vld [vmem:[#allocation2 + $0x98] sm:$0xff]
        %v1293 = vld [vmem:[#allocation2 + $0xa0] sm:$0xff]
        %v1294 = vld [vmem:[#allocation2 + $0xa8] sm:$0xff]
        %v1295 = vld [vmem:[#allocation2 + $0xb0] sm:$0xff]
        %v1296 = vld [vmem:[#allocation2 + $0xb8] sm:$0xff]
        %v1297 = vld [vmem:[#allocation2 + $0xc0] sm:$0xff]
        %v1298 = vld [vmem:[#allocation2 + $0xc8] sm:$0xff]
        %v1299 = vld [vmem:[#allocation2 + $0xd0] sm:$0xff]
        %v1300 = vld [vmem:[#allocation2 + $0xd8] sm:$0xff]
        %v1301 = vld [vmem:[#allocation2 + $0xe0] sm:$0xff]
        %v1302 = vld [vmem:[#allocation2 + $0xe8] sm:$0xff]
        %v1303 = vld [vmem:[#allocation2 + $0xf0] sm:$0xff]
        %v1304 = vld [vmem:[#allocation2 + $0xf8] sm:$0xff]
        %v1305 = vld [vmem:[#allocation2 + $0x100] sm:$0xff]
        %v1306 = vld [vmem:[#allocation2 + $0x108] sm:$0xff]
        %v1307 = vld [vmem:[#allocation2 + $0x110] sm:$0xff]
        %v1308 = vld [vmem:[#allocation2 + $0x118] sm:$0xff]
        %v1309 = vld [vmem:[#allocation2 + $0x120] sm:$0xff]
        %v1310 = vld [vmem:[#allocation2 + $0x128] sm:$0xff]
        %v1311 = vld [vmem:[#allocation2 + $0x130] sm:$0xff]
        %v1312 = vld [vmem:[#allocation2 + $0x138] sm:$0xff]
        %v1313 = vld [vmem:[#allocation2 + $0x140] sm:$0xff]
        %v1314 = vld [vmem:[#allocation2 + $0x148] sm:$0xff]
        %v1315 = vld [vmem:[#allocation2 + $0x150] sm:$0xff]
        %v1316 = vld [vmem:[#allocation2 + $0x158] sm:$0xff]
        %v1317 = vld [vmem:[#allocation2 + $0x160] sm:$0xff]
        %v1318 = vld [vmem:[#allocation2 + $0x168] sm:$0xff]
        %v1319 = vld [vmem:[#allocation2 + $0x170] sm:$0xff]
        %v1320 = vld [vmem:[#allocation2 + $0x178] sm:$0xff]
        %v1321 = vld [vmem:[#allocation2 + $0x180] sm:$0xff]
        %v1322 = vld [vmem:[#allocation2 + $0x188] sm:$0xff]
        %v1323 = vld [vmem:[#allocation2 + $0x190] sm:$0xff]
        %v1324 = vld [vmem:[#allocation2 + $0x198] sm:$0xff]
        %v1325 = vld [vmem:[#allocation2 + $0x1a0] sm:$0xff]
        %v1326 = vld [vmem:[#allocation2 + $0x1a8] sm:$0xff]
        %v1327 = vld [vmem:[#allocation2 + $0x1b0] sm:$0xff]
        %v1328 = vld [vmem:[#allocation2 + $0x1b8] sm:$0xff]
        %v1329 = vld [vmem:[#allocation2 + $0x1c0] sm:$0xff]
        %v1330 = vld [vmem:[#allocation2 + $0x1c8] sm:$0xff]
        %v1331 = vld [vmem:[#allocation2 + $0x1d0] sm:$0xff]
        %v1332 = vld [vmem:[#allocation2 + $0x1d8] sm:$0xff]
        %v1333 = vld [vmem:[#allocation2 + $0x1e0] sm:$0xff]
        %v1334 = vld [vmem:[#allocation2 + $0x1e8] sm:$0xff]
        %v1335 = vld [vmem:[#allocation2 + $0x1f0] sm:$0xff]
        %v1336 = vld [vmem:[#allocation2 + $0x1f8] sm:$0xff]
        %v1337 = vld [vmem:[%s2] sm:$0xff]
        %v1338 = vld [vmem:[%s2 + $0x8] sm:$0xff]
        %v1339 = vld [vmem:[%s2 + $0x10] sm:$0xff]
        %v1340 = vld [vmem:[%s2 + $0x18] sm:$0xff]
        %v1341 = vld [vmem:[%s2 + $0x20] sm:$0xff]
        %v1342 = vld [vmem:[%s2 + $0x28] sm:$0xff]
        %v1343 = vld [vmem:[%s2 + $0x30] sm:$0xff]
        %v1344 = vld [vmem:[%s2 + $0x38] sm:$0xff]
        %v1345 = vld [vmem:[%s2 + $0x40] sm:$0xff]
        %v1346 = vld [vmem:[%s2 + $0x48] sm:$0xff]
        %v1347 = vld [vmem:[%s2 + $0x50] sm:$0xff]
        %v1348 = vld [vmem:[%s2 + $0x58] sm:$0xff]
        %v1349 = vld [vmem:[%s2 + $0x60] sm:$0xff]
        %v1350 = vld [vmem:[%s2 + $0x68] sm:$0xff]
        %v1351 = vld [vmem:[%s2 + $0x70] sm:$0xff]
        %v1352 = vld [vmem:[%s2 + $0x78] sm:$0xff]
        %v1353 = vld [vmem:[%s2 + $0x80] sm:$0xff]
        %v1354 = vld [vmem:[%s2 + $0x88] sm:$0xff]
        %v1355 = vld [vmem:[%s2 + $0x90] sm:$0xff]
        %v1356 = vld [vmem:[%s2 + $0x98] sm:$0xff]
        %v1357 = vld [vmem:[%s2 + $0xa0] sm:$0xff]
        %v1358 = vld [vmem:[%s2 + $0xa8] sm:$0xff]
        %v1359 = vld [vmem:[%s2 + $0xb0] sm:$0xff]
        %v1360 = vld [vmem:[%s2 + $0xb8] sm:$0xff]
        %v1361 = vld [vmem:[%s2 + $0xc0] sm:$0xff]
        %v1362 = vld [vmem:[%s2 + $0xc8] sm:$0xff]
        %v1363 = vld [vmem:[%s2 + $0xd0] sm:$0xff]
        %v1364 = vld [vmem:[%s2 + $0xd8] sm:$0xff]
        %v1365 = vld [vmem:[%s2 + $0xe0] sm:$0xff]
        %v1366 = vld [vmem:[%s2 + $0xe8] sm:$0xff]
        %v1367 = vld [vmem:[%s2 + $0xf0] sm:$0xff]
        %v1368 = vld [vmem:[%s2 + $0xf8] sm:$0xff]
        %v1369 = vld [vmem:[%s2 + $0x100] sm:$0xff]
        %v1370 = vld [vmem:[%s2 + $0x108] sm:$0xff]
        %v1371 = vld [vmem:[%s2 + $0x110] sm:$0xff]
        %v1372 = vld [vmem:[%s2 + $0x118] sm:$0xff]
        %v1373 = vld [vmem:[%s2 + $0x120] sm:$0xff]
        %v1374 = vld [vmem:[%s2 + $0x128] sm:$0xff]
        %v1375 = vld [vmem:[%s2 + $0x130] sm:$0xff]
        %v1376 = vld [vmem:[%s2 + $0x138] sm:$0xff]
        %v1377 = vld [vmem:[%s2 + $0x140] sm:$0xff]
        %v1378 = vld [vmem:[%s2 + $0x148] sm:$0xff]
        %v1379 = vld [vmem:[%s2 + $0x150] sm:$0xff]
        %v1380 = vld [vmem:[%s2 + $0x158] sm:$0xff]
        %v1381 = vld [vmem:[%s2 + $0x160] sm:$0xff]
        %v1382 = vld [vmem:[%s2 + $0x168] sm:$0xff]
        %v1383 = vld [vmem:[%s2 + $0x170] sm:$0xff]
        %v1384 = vld [vmem:[%s2 + $0x178] sm:$0xff]
        %v1385 = vld [vmem:[%s2 + $0x180] sm:$0xff]
        %v1386 = vld [vmem:[%s2 + $0x188] sm:$0xff]
        %v1387 = vld [vmem:[%s2 + $0x190] sm:$0xff]
        %v1388 = vld [vmem:[%s2 + $0x198] sm:$0xff]
        %v1389 = vld [vmem:[%s2 + $0x1a0] sm:$0xff]
        %v1390 = vld [vmem:[%s2 + $0x1a8] sm:$0xff]
        %v1391 = vld [vmem:[%s2 + $0x1b0] sm:$0xff]
        %v1392 = vld [vmem:[%s2 + $0x1b8] sm:$0xff]
        %v1393 = vld [vmem:[%s2 + $0x1c0] sm:$0xff]
        %v1394 = vld [vmem:[%s2 + $0x1c8] sm:$0xff]
        %v1395 = vld [vmem:[%s2 + $0x1d0] sm:$0xff]
        %v1396 = vld [vmem:[%s2 + $0x1d8] sm:$0xff]
        %v1397 = vld [vmem:[%s2 + $0x1e0] sm:$0xff]
        %v1398 = vld [vmem:[%s2 + $0x1e8] sm:$0xff]
        %v1399 = vld [vmem:[%s2 + $0x1f0] sm:$0xff]
        %v1400 = vld [vmem:[%s2 + $0x1f8] sm:$0xff]
        %1402 = vset.pattern.permute.xlu0 0
        %1403 = vperm.xlu0 %1402, %v1337
        %v1404 = vpop.permute.xlu0 %1403
        %1407 = vset.pattern.permute.xlu0 0
        %1408 = vperm.xlu0 %1407, %v1338
        %v1409 = vpop.permute.xlu0 %1408
        %1412 = vset.pattern.permute.xlu0 0
        %1413 = vperm.xlu0 %1412, %v1339
        %v1414 = vpop.permute.xlu0 %1413
        %1417 = vset.pattern.permute.xlu0 0
        %1418 = vperm.xlu0 %1417, %v1340
        %v1419 = vpop.permute.xlu0 %1418
        %1422 = vset.pattern.permute.xlu0 0
        %1423 = vperm.xlu0 %1422, %v1341
        %v1424 = vpop.permute.xlu0 %1423
        %1427 = vset.pattern.permute.xlu0 0
        %1428 = vperm.xlu0 %1427, %v1342
        %v1429 = vpop.permute.xlu0 %1428
        %1432 = vset.pattern.permute.xlu0 0
        %1433 = vperm.xlu0 %1432, %v1343
        %v1434 = vpop.permute.xlu0 %1433
        %1437 = vset.pattern.permute.xlu0 0
        %1438 = vperm.xlu0 %1437, %v1344
        %v1439 = vpop.permute.xlu0 %1438
        %1442 = vset.pattern.permute.xlu0 0
        %1443 = vperm.xlu0 %1442, %v1345
        %v1444 = vpop.permute.xlu0 %1443
        %1447 = vset.pattern.permute.xlu0 0
        %1448 = vperm.xlu0 %1447, %v1346
        %v1449 = vpop.permute.xlu0 %1448
        %1452 = vset.pattern.permute.xlu0 0
        %1453 = vperm.xlu0 %1452, %v1347
        %v1454 = vpop.permute.xlu0 %1453
        %1457 = vset.pattern.permute.xlu0 0
        %1458 = vperm.xlu0 %1457, %v1348
        %v1459 = vpop.permute.xlu0 %1458
        %1462 = vset.pattern.permute.xlu0 0
        %1463 = vperm.xlu0 %1462, %v1349
        %v1464 = vpop.permute.xlu0 %1463
        %1467 = vset.pattern.permute.xlu0 0
        %1468 = vperm.xlu0 %1467, %v1350
        %v1469 = vpop.permute.xlu0 %1468
        %1472 = vset.pattern.permute.xlu0 0
        %1473 = vperm.xlu0 %1472, %v1351
        %v1474 = vpop.permute.xlu0 %1473
        %1477 = vset.pattern.permute.xlu0 0
        %1478 = vperm.xlu0 %1477, %v1352
        %v1479 = vpop.permute.xlu0 %1478
        %1482 = vset.pattern.permute.xlu0 0
        %1483 = vperm.xlu0 %1482, %v1353
        %v1484 = vpop.permute.xlu0 %1483
        %1487 = vset.pattern.permute.xlu0 0
        %1488 = vperm.xlu0 %1487, %v1354
        %v1489 = vpop.permute.xlu0 %1488
        %1492 = vset.pattern.permute.xlu0 0
        %1493 = vperm.xlu0 %1492, %v1355
        %v1494 = vpop.permute.xlu0 %1493
        %1497 = vset.pattern.permute.xlu0 0
        %1498 = vperm.xlu0 %1497, %v1356
        %v1499 = vpop.permute.xlu0 %1498
        %1502 = vset.pattern.permute.xlu0 0
        %1503 = vperm.xlu0 %1502, %v1357
        %v1504 = vpop.permute.xlu0 %1503
        %1507 = vset.pattern.permute.xlu0 0
        %1508 = vperm.xlu0 %1507, %v1358
        %v1509 = vpop.permute.xlu0 %1508
        %1512 = vset.pattern.permute.xlu0 0
        %1513 = vperm.xlu0 %1512, %v1359
        %v1514 = vpop.permute.xlu0 %1513
        %1517 = vset.pattern.permute.xlu0 0
        %1518 = vperm.xlu0 %1517, %v1360
        %v1519 = vpop.permute.xlu0 %1518
        %1522 = vset.pattern.permute.xlu0 0
        %1523 = vperm.xlu0 %1522, %v1361
        %v1524 = vpop.permute.xlu0 %1523
        %1527 = vset.pattern.permute.xlu0 0
        %1528 = vperm.xlu0 %1527, %v1362
        %v1529 = vpop.permute.xlu0 %1528
        %1532 = vset.pattern.permute.xlu0 0
        %1533 = vperm.xlu0 %1532, %v1363
        %v1534 = vpop.permute.xlu0 %1533
        %1537 = vset.pattern.permute.xlu0 0
        %1538 = vperm.xlu0 %1537, %v1364
        %v1539 = vpop.permute.xlu0 %1538
        %1542 = vset.pattern.permute.xlu0 0
        %1543 = vperm.xlu0 %1542, %v1365
        %v1544 = vpop.permute.xlu0 %1543
        %1547 = vset.pattern.permute.xlu0 0
        %1548 = vperm.xlu0 %1547, %v1366
        %v1549 = vpop.permute.xlu0 %1548
        %1552 = vset.pattern.permute.xlu0 0
        %1553 = vperm.xlu0 %1552, %v1367
        %v1554 = vpop.permute.xlu0 %1553
        %1557 = vset.pattern.permute.xlu0 0
        %1558 = vperm.xlu0 %1557, %v1368
        %v1559 = vpop.permute.xlu0 %1558
        %1562 = vset.pattern.permute.xlu0 0
        %1563 = vperm.xlu0 %1562, %v1369
        %v1564 = vpop.permute.xlu0 %1563
        %1567 = vset.pattern.permute.xlu0 0
        %1568 = vperm.xlu0 %1567, %v1370
        %v1569 = vpop.permute.xlu0 %1568
        %1572 = vset.pattern.permute.xlu0 0
        %1573 = vperm.xlu0 %1572, %v1371
        %v1574 = vpop.permute.xlu0 %1573
        %1577 = vset.pattern.permute.xlu0 0
        %1578 = vperm.xlu0 %1577, %v1372
        %v1579 = vpop.permute.xlu0 %1578
        %1582 = vset.pattern.permute.xlu0 0
        %1583 = vperm.xlu0 %1582, %v1373
        %v1584 = vpop.permute.xlu0 %1583
        %1587 = vset.pattern.permute.xlu0 0
        %1588 = vperm.xlu0 %1587, %v1374
        %v1589 = vpop.permute.xlu0 %1588
        %1592 = vset.pattern.permute.xlu0 0
        %1593 = vperm.xlu0 %1592, %v1375
        %v1594 = vpop.permute.xlu0 %1593
        %1597 = vset.pattern.permute.xlu0 0
        %1598 = vperm.xlu0 %1597, %v1376
        %v1599 = vpop.permute.xlu0 %1598
        %1602 = vset.pattern.permute.xlu0 0
        %1603 = vperm.xlu0 %1602, %v1377
        %v1604 = vpop.permute.xlu0 %1603
        %1607 = vset.pattern.permute.xlu0 0
        %1608 = vperm.xlu0 %1607, %v1378
        %v1609 = vpop.permute.xlu0 %1608
        %1612 = vset.pattern.permute.xlu0 0
        %1613 = vperm.xlu0 %1612, %v1379
        %v1614 = vpop.permute.xlu0 %1613
        %1617 = vset.pattern.permute.xlu0 0
        %1618 = vperm.xlu0 %1617, %v1380
        %v1619 = vpop.permute.xlu0 %1618
        %1622 = vset.pattern.permute.xlu0 0
        %1623 = vperm.xlu0 %1622, %v1381
        %v1624 = vpop.permute.xlu0 %1623
        %1627 = vset.pattern.permute.xlu0 0
        %1628 = vperm.xlu0 %1627, %v1382
        %v1629 = vpop.permute.xlu0 %1628
        %1632 = vset.pattern.permute.xlu0 0
        %1633 = vperm.xlu0 %1632, %v1383
        %v1634 = vpop.permute.xlu0 %1633
        %1637 = vset.pattern.permute.xlu0 0
        %1638 = vperm.xlu0 %1637, %v1384
        %v1639 = vpop.permute.xlu0 %1638
        %1642 = vset.pattern.permute.xlu0 0
        %1643 = vperm.xlu0 %1642, %v1385
        %v1644 = vpop.permute.xlu0 %1643
        %1647 = vset.pattern.permute.xlu0 0
        %1648 = vperm.xlu0 %1647, %v1386
        %v1649 = vpop.permute.xlu0 %1648
        %1652 = vset.pattern.permute.xlu0 0
        %1653 = vperm.xlu0 %1652, %v1387
        %v1654 = vpop.permute.xlu0 %1653
        %1657 = vset.pattern.permute.xlu0 0
        %1658 = vperm.xlu0 %1657, %v1388
        %v1659 = vpop.permute.xlu0 %1658
        %1662 = vset.pattern.permute.xlu0 0
        %1663 = vperm.xlu0 %1662, %v1389
        %v1664 = vpop.permute.xlu0 %1663
        %1667 = vset.pattern.permute.xlu0 0
        %1668 = vperm.xlu0 %1667, %v1390
        %v1669 = vpop.permute.xlu0 %1668
        %1672 = vset.pattern.permute.xlu0 0
        %1673 = vperm.xlu0 %1672, %v1391
        %v1674 = vpop.permute.xlu0 %1673
        %1677 = vset.pattern.permute.xlu0 0
        %1678 = vperm.xlu0 %1677, %v1392
        %v1679 = vpop.permute.xlu0 %1678
        %1682 = vset.pattern.permute.xlu0 0
        %1683 = vperm.xlu0 %1682, %v1393
        %v1684 = vpop.permute.xlu0 %1683
        %1687 = vset.pattern.permute.xlu0 0
        %1688 = vperm.xlu0 %1687, %v1394
        %v1689 = vpop.permute.xlu0 %1688
        %1692 = vset.pattern.permute.xlu0 0
        %1693 = vperm.xlu0 %1692, %v1395
        %v1694 = vpop.permute.xlu0 %1693
        %1697 = vset.pattern.permute.xlu0 0
        %1698 = vperm.xlu0 %1697, %v1396
        %v1699 = vpop.permute.xlu0 %1698
        %1702 = vset.pattern.permute.xlu0 0
        %1703 = vperm.xlu0 %1702, %v1397
        %v1704 = vpop.permute.xlu0 %1703
        %1707 = vset.pattern.permute.xlu0 0
        %1708 = vperm.xlu0 %1707, %v1398
        %v1709 = vpop.permute.xlu0 %1708
        %1712 = vset.pattern.permute.xlu0 0
        %1713 = vperm.xlu0 %1712, %v1399
        %v1714 = vpop.permute.xlu0 %1713
        %1717 = vset.pattern.permute.xlu0 0
        %1718 = vperm.xlu0 %1717, %v1400
        %v1719 = vpop.permute.xlu0 %1718
        %v1721 = vadd.f32 %v1273, %v1404
        %v1722 = vadd.f32 %v1274, %v1409
        %v1723 = vadd.f32 %v1275, %v1414
        %v1724 = vadd.f32 %v1276, %v1419
        %v1725 = vadd.f32 %v1277, %v1424
        %v1726 = vadd.f32 %v1278, %v1429
        %v1727 = vadd.f32 %v1279, %v1434
        %v1728 = vadd.f32 %v1280, %v1439
        %v1729 = vadd.f32 %v1281, %v1444
        %v1730 = vadd.f32 %v1282, %v1449
        %v1731 = vadd.f32 %v1283, %v1454
        %v1732 = vadd.f32 %v1284, %v1459
        %v1733 = vadd.f32 %v1285, %v1464
        %v1734 = vadd.f32 %v1286, %v1469
        %v1735 = vadd.f32 %v1287, %v1474
        %v1736 = vadd.f32 %v1288, %v1479
        %v1737 = vadd.f32 %v1289, %v1484
        %v1738 = vadd.f32 %v1290, %v1489
        %v1739 = vadd.f32 %v1291, %v1494
        %v1740 = vadd.f32 %v1292, %v1499
        %v1741 = vadd.f32 %v1293, %v1504
        %v1742 = vadd.f32 %v1294, %v1509
        %v1743 = vadd.f32 %v1295, %v1514
        %v1744 = vadd.f32 %v1296, %v1519
        %v1745 = vadd.f32 %v1297, %v1524
        %v1746 = vadd.f32 %v1298, %v1529
        %v1747 = vadd.f32 %v1299, %v1534
        %v1748 = vadd.f32 %v1300, %v1539
        %v1749 = vadd.f32 %v1301, %v1544
        %v1750 = vadd.f32 %v1302, %v1549
        %v1751 = vadd.f32 %v1303, %v1554
        %v1752 = vadd.f32 %v1304, %v1559
        %v1753 = vadd.f32 %v1305, %v1564
        %v1754 = vadd.f32 %v1306, %v1569
        %v1755 = vadd.f32 %v1307, %v1574
        %v1756 = vadd.f32 %v1308, %v1579
        %v1757 = vadd.f32 %v1309, %v1584
        %v1758 = vadd.f32 %v1310, %v1589
        %v1759 = vadd.f32 %v1311, %v1594
        %v1760 = vadd.f32 %v1312, %v1599
        %v1761 = vadd.f32 %v1313, %v1604
        %v1762 = vadd.f32 %v1314, %v1609
        %v1763 = vadd.f32 %v1315, %v1614
        %v1764 = vadd.f32 %v1316, %v1619
        %v1765 = vadd.f32 %v1317, %v1624
        %v1766 = vadd.f32 %v1318, %v1629
        %v1767 = vadd.f32 %v1319, %v1634
        %v1768 = vadd.f32 %v1320, %v1639
        %v1769 = vadd.f32 %v1321, %v1644
        %v1770 = vadd.f32 %v1322, %v1649
        %v1771 = vadd.f32 %v1323, %v1654
        %v1772 = vadd.f32 %v1324, %v1659
        %v1773 = vadd.f32 %v1325, %v1664
        %v1774 = vadd.f32 %v1326, %v1669
        %v1775 = vadd.f32 %v1327, %v1674
        %v1776 = vadd.f32 %v1328, %v1679
        %v1777 = vadd.f32 %v1329, %v1684
        %v1778 = vadd.f32 %v1330, %v1689
        %v1779 = vadd.f32 %v1331, %v1694
        %v1780 = vadd.f32 %v1332, %v1699
        %v1781 = vadd.f32 %v1333, %v1704
        %v1782 = vadd.f32 %v1334, %v1709
        %v1783 = vadd.f32 %v1335, %v1714
        %v1784 = vadd.f32 %v1336, %v1719
        %v1785 = vmax.f32 %v1721, 0.0
        %v1786 = vmax.f32 %v1722, 0.0
        %v1787 = vmax.f32 %v1723, 0.0
        %v1788 = vmax.f32 %v1724, 0.0
        %v1789 = vmax.f32 %v1725, 0.0
        %v1790 = vmax.f32 %v1726, 0.0
        %v1791 = vmax.f32 %v1727, 0.0
        %v1792 = vmax.f32 %v1728, 0.0
        %v1793 = vmax.f32 %v1729, 0.0
        %v1794 = vmax.f32 %v1730, 0.0
        %v1795 = vmax.f32 %v1731, 0.0
        %v1796 = vmax.f32 %v1732, 0.0
        %v1797 = vmax.f32 %v1733, 0.0
        %v1798 = vmax.f32 %v1734, 0.0
        %v1799 = vmax.f32 %v1735, 0.0
        %v1800 = vmax.f32 %v1736, 0.0
        %v1801 = vmax.f32 %v1737, 0.0
        %v1802 = vmax.f32 %v1738, 0.0
        %v1803 = vmax.f32 %v1739, 0.0
        %v1804 = vmax.f32 %v1740, 0.0
        %v1805 = vmax.f32 %v1741, 0.0
        %v1806 = vmax.f32 %v1742, 0.0
        %v1807 = vmax.f32 %v1743, 0.0
        %v1808 = vmax.f32 %v1744, 0.0
        %v1809 = vmax.f32 %v1745, 0.0
        %v1810 = vmax.f32 %v1746, 0.0
        %v1811 = vmax.f32 %v1747, 0.0
        %v1812 = vmax.f32 %v1748, 0.0
        %v1813 = vmax.f32 %v1749, 0.0
        %v1814 = vmax.f32 %v1750, 0.0
        %v1815 = vmax.f32 %v1751, 0.0
        %v1816 = vmax.f32 %v1752, 0.0
        %v1817 = vmax.f32 %v1753, 0.0
        %v1818 = vmax.f32 %v1754, 0.0
        %v1819 = vmax.f32 %v1755, 0.0
        %v1820 = vmax.f32 %v1756, 0.0
        %v1821 = vmax.f32 %v1757, 0.0
        %v1822 = vmax.f32 %v1758, 0.0
        %v1823 = vmax.f32 %v1759, 0.0
        %v1824 = vmax.f32 %v1760, 0.0
        %v1825 = vmax.f32 %v1761, 0.0
        %v1826 = vmax.f32 %v1762, 0.0
        %v1827 = vmax.f32 %v1763, 0.0
        %v1828 = vmax.f32 %v1764, 0.0
        %v1829 = vmax.f32 %v1765, 0.0
        %v1830 = vmax.f32 %v1766, 0.0
        %v1831 = vmax.f32 %v1767, 0.0
        %v1832 = vmax.f32 %v1768, 0.0
        %v1833 = vmax.f32 %v1769, 0.0
        %v1834 = vmax.f32 %v1770, 0.0
        %v1835 = vmax.f32 %v1771, 0.0
        %v1836 = vmax.f32 %v1772, 0.0
        %v1837 = vmax.f32 %v1773, 0.0
        %v1838 = vmax.f32 %v1774, 0.0
        %v1839 = vmax.f32 %v1775, 0.0
        %v1840 = vmax.f32 %v1776, 0.0
        %v1841 = vmax.f32 %v1777, 0.0
        %v1842 = vmax.f32 %v1778, 0.0
        %v1843 = vmax.f32 %v1779, 0.0
        %v1844 = vmax.f32 %v1780, 0.0
        %v1845 = vmax.f32 %v1781, 0.0
        %v1846 = vmax.f32 %v1782, 0.0
        %v1847 = vmax.f32 %v1783, 0.0
        %v1848 = vmax.f32 %v1784, 0.0
        %v1849 = vld [vmem:[%s3] sm:$0xff]
        %v1850 = vld [vmem:[%s3 + $0x8] sm:$0xff]
        %v1851 = vld [vmem:[%s3 + $0x10] sm:$0xff]
        %v1852 = vld [vmem:[%s3 + $0x18] sm:$0xff]
        %v1853 = vld [vmem:[%s3 + $0x20] sm:$0xff]
        %v1854 = vld [vmem:[%s3 + $0x28] sm:$0xff]
        %v1855 = vld [vmem:[%s3 + $0x30] sm:$0xff]
        %v1856 = vld [vmem:[%s3 + $0x38] sm:$0xff]
        %v1857 = vld [vmem:[%s3 + $0x40] sm:$0xff]
        %v1858 = vld [vmem:[%s3 + $0x48] sm:$0xff]
        %v1859 = vld [vmem:[%s3 + $0x50] sm:$0xff]
        %v1860 = vld [vmem:[%s3 + $0x58] sm:$0xff]
        %v1861 = vld [vmem:[%s3 + $0x60] sm:$0xff]
        %v1862 = vld [vmem:[%s3 + $0x68] sm:$0xff]
        %v1863 = vld [vmem:[%s3 + $0x70] sm:$0xff]
        %v1864 = vld [vmem:[%s3 + $0x78] sm:$0xff]
        %v1865 = vld [vmem:[%s3 + $0x80] sm:$0xff]
        %v1866 = vld [vmem:[%s3 + $0x88] sm:$0xff]
        %v1867 = vld [vmem:[%s3 + $0x90] sm:$0xff]
        %v1868 = vld [vmem:[%s3 + $0x98] sm:$0xff]
        %v1869 = vld [vmem:[%s3 + $0xa0] sm:$0xff]
        %v1870 = vld [vmem:[%s3 + $0xa8] sm:$0xff]
        %v1871 = vld [vmem:[%s3 + $0xb0] sm:$0xff]
        %v1872 = vld [vmem:[%s3 + $0xb8] sm:$0xff]
        %v1873 = vld [vmem:[%s3 + $0xc0] sm:$0xff]
        %v1874 = vld [vmem:[%s3 + $0xc8] sm:$0xff]
        %v1875 = vld [vmem:[%s3 + $0xd0] sm:$0xff]
        %v1876 = vld [vmem:[%s3 + $0xd8] sm:$0xff]
        %v1877 = vld [vmem:[%s3 + $0xe0] sm:$0xff]
        %v1878 = vld [vmem:[%s3 + $0xe8] sm:$0xff]
        %v1879 = vld [vmem:[%s3 + $0xf0] sm:$0xff]
        %v1880 = vld [vmem:[%s3 + $0xf8] sm:$0xff]
        %v1881 = vld [vmem:[%s3 + $0x100] sm:$0xff]
        %v1882 = vld [vmem:[%s3 + $0x108] sm:$0xff]
        %v1883 = vld [vmem:[%s3 + $0x110] sm:$0xff]
        %v1884 = vld [vmem:[%s3 + $0x118] sm:$0xff]
        %v1885 = vld [vmem:[%s3 + $0x120] sm:$0xff]
        %v1886 = vld [vmem:[%s3 + $0x128] sm:$0xff]
        %v1887 = vld [vmem:[%s3 + $0x130] sm:$0xff]
        %v1888 = vld [vmem:[%s3 + $0x138] sm:$0xff]
        %v1889 = vld [vmem:[%s3 + $0x140] sm:$0xff]
        %v1890 = vld [vmem:[%s3 + $0x148] sm:$0xff]
        %v1891 = vld [vmem:[%s3 + $0x150] sm:$0xff]
        %v1892 = vld [vmem:[%s3 + $0x158] sm:$0xff]
        %v1893 = vld [vmem:[%s3 + $0x160] sm:$0xff]
        %v1894 = vld [vmem:[%s3 + $0x168] sm:$0xff]
        %v1895 = vld [vmem:[%s3 + $0x170] sm:$0xff]
        %v1896 = vld [vmem:[%s3 + $0x178] sm:$0xff]
        %v1897 = vld [vmem:[%s3 + $0x180] sm:$0xff]
        %v1898 = vld [vmem:[%s3 + $0x188] sm:$0xff]
        %v1899 = vld [vmem:[%s3 + $0x190] sm:$0xff]
        %v1900 = vld [vmem:[%s3 + $0x198] sm:$0xff]
        %v1901 = vld [vmem:[%s3 + $0x1a0] sm:$0xff]
        %v1902 = vld [vmem:[%s3 + $0x1a8] sm:$0xff]
        %v1903 = vld [vmem:[%s3 + $0x1b0] sm:$0xff]
        %v1904 = vld [vmem:[%s3 + $0x1b8] sm:$0xff]
        %v1905 = vld [vmem:[%s3 + $0x1c0] sm:$0xff]
        %v1906 = vld [vmem:[%s3 + $0x1c8] sm:$0xff]
        %v1907 = vld [vmem:[%s3 + $0x1d0] sm:$0xff]
        %v1908 = vld [vmem:[%s3 + $0x1d8] sm:$0xff]
        %v1909 = vld [vmem:[%s3 + $0x1e0] sm:$0xff]
        %v1910 = vld [vmem:[%s3 + $0x1e8] sm:$0xff]
        %v1911 = vld [vmem:[%s3 + $0x1f0] sm:$0xff]
        %v1912 = vld [vmem:[%s3 + $0x1f8] sm:$0xff]
        %v1913 = vpack.c.bf16 %v1786, %v1785
        %v1914 = vpack.c.bf16 %v1788, %v1787
        %v1915 = vpack.c.bf16 %v1790, %v1789
        %v1916 = vpack.c.bf16 %v1792, %v1791
        %v1917 = vpack.c.bf16 %v1794, %v1793
        %v1918 = vpack.c.bf16 %v1796, %v1795
        %v1919 = vpack.c.bf16 %v1798, %v1797
        %v1920 = vpack.c.bf16 %v1800, %v1799
        %v1921 = vpack.c.bf16 %v1802, %v1801
        %v1922 = vpack.c.bf16 %v1804, %v1803
        %v1923 = vpack.c.bf16 %v1806, %v1805
        %v1924 = vpack.c.bf16 %v1808, %v1807
        %v1925 = vpack.c.bf16 %v1810, %v1809
        %v1926 = vpack.c.bf16 %v1812, %v1811
        %v1927 = vpack.c.bf16 %v1814, %v1813
        %v1928 = vpack.c.bf16 %v1816, %v1815
        %v1929 = vpack.c.bf16 %v1818, %v1817
        %v1930 = vpack.c.bf16 %v1820, %v1819
        %v1931 = vpack.c.bf16 %v1822, %v1821
        %v1932 = vpack.c.bf16 %v1824, %v1823
        %v1933 = vpack.c.bf16 %v1826, %v1825
        %v1934 = vpack.c.bf16 %v1828, %v1827
        %v1935 = vpack.c.bf16 %v1830, %v1829
        %v1936 = vpack.c.bf16 %v1832, %v1831
        %v1937 = vpack.c.bf16 %v1834, %v1833
        %v1938 = vpack.c.bf16 %v1836, %v1835
        %v1939 = vpack.c.bf16 %v1838, %v1837
        %v1940 = vpack.c.bf16 %v1840, %v1839
        %v1941 = vpack.c.bf16 %v1842, %v1841
        %v1942 = vpack.c.bf16 %v1844, %v1843
        %v1943 = vpack.c.bf16 %v1846, %v1845
        %v1944 = vpack.c.bf16 %v1848, %v1847
        %v1945 = vld [vmem:[%s4] sm:$0xff]
        %v1946 = vld [vmem:[%s4 + $0x8] sm:$0xff]
        %v1947 = vld [vmem:[%s4 + $0x10] sm:$0xff]
        %v1948 = vld [vmem:[%s4 + $0x18] sm:$0xff]
        %v1949 = vld [vmem:[%s4 + $0x20] sm:$0xff]
        %v1950 = vld [vmem:[%s4 + $0x28] sm:$0xff]
        %v1951 = vld [vmem:[%s4 + $0x30] sm:$0xff]
        %v1952 = vld [vmem:[%s4 + $0x38] sm:$0xff]
        %v1953 = vld [vmem:[%s4 + $0x40] sm:$0xff]
        %v1954 = vld [vmem:[%s4 + $0x48] sm:$0xff]
        %v1955 = vld [vmem:[%s4 + $0x50] sm:$0xff]
        %v1956 = vld [vmem:[%s4 + $0x58] sm:$0xff]
        %v1957 = vld [vmem:[%s4 + $0x60] sm:$0xff]
        %v1958 = vld [vmem:[%s4 + $0x68] sm:$0xff]
        %v1959 = vld [vmem:[%s4 + $0x70] sm:$0xff]
        %v1960 = vld [vmem:[%s4 + $0x78] sm:$0xff]
        %v1961 = vld [vmem:[%s4 + $0x80] sm:$0xff]
        %v1962 = vld [vmem:[%s4 + $0x88] sm:$0xff]
        %v1963 = vld [vmem:[%s4 + $0x90] sm:$0xff]
        %v1964 = vld [vmem:[%s4 + $0x98] sm:$0xff]
        %v1965 = vld [vmem:[%s4 + $0xa0] sm:$0xff]
        %v1966 = vld [vmem:[%s4 + $0xa8] sm:$0xff]
        %v1967 = vld [vmem:[%s4 + $0xb0] sm:$0xff]
        %v1968 = vld [vmem:[%s4 + $0xb8] sm:$0xff]
        %v1969 = vld [vmem:[%s4 + $0xc0] sm:$0xff]
        %v1970 = vld [vmem:[%s4 + $0xc8] sm:$0xff]
        %v1971 = vld [vmem:[%s4 + $0xd0] sm:$0xff]
        %v1972 = vld [vmem:[%s4 + $0xd8] sm:$0xff]
        %v1973 = vld [vmem:[%s4 + $0xe0] sm:$0xff]
        %v1974 = vld [vmem:[%s4 + $0xe8] sm:$0xff]
        %v1975 = vld [vmem:[%s4 + $0xf0] sm:$0xff]
        %v1976 = vld [vmem:[%s4 + $0xf8] sm:$0xff]
        %1978 = vset.pattern.permute.xlu0 0
        %1979 = vperm.xlu0 %1978, %v1945
        %v1980 = vpop.permute.xlu0 %1979
        %1983 = vset.pattern.permute.xlu0 0
        %1984 = vperm.xlu0 %1983, %v1946
        %v1985 = vpop.permute.xlu0 %1984
        %1988 = vset.pattern.permute.xlu0 0
        %1989 = vperm.xlu0 %1988, %v1947
        %v1990 = vpop.permute.xlu0 %1989
        %1993 = vset.pattern.permute.xlu0 0
        %1994 = vperm.xlu0 %1993, %v1948
        %v1995 = vpop.permute.xlu0 %1994
        %1998 = vset.pattern.permute.xlu0 0
        %1999 = vperm.xlu0 %1998, %v1949
        %v2000 = vpop.permute.xlu0 %1999
        %2003 = vset.pattern.permute.xlu0 0
        %2004 = vperm.xlu0 %2003, %v1950
        %v2005 = vpop.permute.xlu0 %2004
        %2008 = vset.pattern.permute.xlu0 0
        %2009 = vperm.xlu0 %2008, %v1951
        %v2010 = vpop.permute.xlu0 %2009
        %2013 = vset.pattern.permute.xlu0 0
        %2014 = vperm.xlu0 %2013, %v1952
        %v2015 = vpop.permute.xlu0 %2014
        %2018 = vset.pattern.permute.xlu0 0
        %2019 = vperm.xlu0 %2018, %v1953
        %v2020 = vpop.permute.xlu0 %2019
        %2023 = vset.pattern.permute.xlu0 0
        %2024 = vperm.xlu0 %2023, %v1954
        %v2025 = vpop.permute.xlu0 %2024
        %2028 = vset.pattern.permute.xlu0 0
        %2029 = vperm.xlu0 %2028, %v1955
        %v2030 = vpop.permute.xlu0 %2029
        %2033 = vset.pattern.permute.xlu0 0
        %2034 = vperm.xlu0 %2033, %v1956
        %v2035 = vpop.permute.xlu0 %2034
        %2038 = vset.pattern.permute.xlu0 0
        %2039 = vperm.xlu0 %2038, %v1957
        %v2040 = vpop.permute.xlu0 %2039
        %2043 = vset.pattern.permute.xlu0 0
        %2044 = vperm.xlu0 %2043, %v1958
        %v2045 = vpop.permute.xlu0 %2044
        %2048 = vset.pattern.permute.xlu0 0
        %2049 = vperm.xlu0 %2048, %v1959
        %v2050 = vpop.permute.xlu0 %2049
        %2053 = vset.pattern.permute.xlu0 0
        %2054 = vperm.xlu0 %2053, %v1960
        %v2055 = vpop.permute.xlu0 %2054
        %2058 = vset.pattern.permute.xlu0 0
        %2059 = vperm.xlu0 %2058, %v1961
        %v2060 = vpop.permute.xlu0 %2059
        %2063 = vset.pattern.permute.xlu0 0
        %2064 = vperm.xlu0 %2063, %v1962
        %v2065 = vpop.permute.xlu0 %2064
        %2068 = vset.pattern.permute.xlu0 0
        %2069 = vperm.xlu0 %2068, %v1963
        %v2070 = vpop.permute.xlu0 %2069
        %2073 = vset.pattern.permute.xlu0 0
        %2074 = vperm.xlu0 %2073, %v1964
        %v2075 = vpop.permute.xlu0 %2074
        %2078 = vset.pattern.permute.xlu0 0
        %2079 = vperm.xlu0 %2078, %v1965
        %v2080 = vpop.permute.xlu0 %2079
        %2083 = vset.pattern.permute.xlu0 0
        %2084 = vperm.xlu0 %2083, %v1966
        %v2085 = vpop.permute.xlu0 %2084
        %2088 = vset.pattern.permute.xlu0 0
        %2089 = vperm.xlu0 %2088, %v1967
        %v2090 = vpop.permute.xlu0 %2089
        %2093 = vset.pattern.permute.xlu0 0
        %2094 = vperm.xlu0 %2093, %v1968
        %v2095 = vpop.permute.xlu0 %2094
        %2098 = vset.pattern.permute.xlu0 0
        %2099 = vperm.xlu0 %2098, %v1969
        %v2100 = vpop.permute.xlu0 %2099
        %2103 = vset.pattern.permute.xlu0 0
        %2104 = vperm.xlu0 %2103, %v1970
        %v2105 = vpop.permute.xlu0 %2104
        %2108 = vset.pattern.permute.xlu0 0
        %2109 = vperm.xlu0 %2108, %v1971
        %v2110 = vpop.permute.xlu0 %2109
        %2113 = vset.pattern.permute.xlu0 0
        %2114 = vperm.xlu0 %2113, %v1972
        %v2115 = vpop.permute.xlu0 %2114
        %2118 = vset.pattern.permute.xlu0 0
        %2119 = vperm.xlu0 %2118, %v1973
        %v2120 = vpop.permute.xlu0 %2119
        %2123 = vset.pattern.permute.xlu0 0
        %2124 = vperm.xlu0 %2123, %v1974
        %v2125 = vpop.permute.xlu0 %2124
        %2128 = vset.pattern.permute.xlu0 0
        %2129 = vperm.xlu0 %2128, %v1975
        %v2130 = vpop.permute.xlu0 %2129
        %2133 = vset.pattern.permute.xlu0 0
        %2134 = vperm.xlu0 %2133, %v1976
        %v2135 = vpop.permute.xlu0 %2134
        %v2201 = vunpack.c.l.b16 %v1849
        %v2202 = vunpack.c.h.b16 %v1849
        %v2203 = vunpack.c.l.b16 %v1850
        %v2204 = vunpack.c.h.b16 %v1850
        %v2205 = vunpack.c.l.b16 %v1851
        %v2206 = vunpack.c.h.b16 %v1851
        %v2207 = vunpack.c.l.b16 %v1852
        %v2208 = vunpack.c.h.b16 %v1852
        %v2209 = vunpack.c.l.b16 %v1853
        %v2210 = vunpack.c.h.b16 %v1853
        %v2211 = vunpack.c.l.b16 %v1854
        %v2212 = vunpack.c.h.b16 %v1854
        %v2213 = vunpack.c.l.b16 %v1855
        %v2214 = vunpack.c.h.b16 %v1855
        %v2215 = vunpack.c.l.b16 %v1856
        %v2216 = vunpack.c.h.b16 %v1856
        %v2217 = vunpack.c.l.b16 %v1857
        %v2218 = vunpack.c.h.b16 %v1857
        %v2219 = vunpack.c.l.b16 %v1858
        %v2220 = vunpack.c.h.b16 %v1858
        %v2221 = vunpack.c.l.b16 %v1859
        %v2222 = vunpack.c.h.b16 %v1859
        %v2223 = vunpack.c.l.b16 %v1860
        %v2224 = vunpack.c.h.b16 %v1860
        %v2225 = vunpack.c.l.b16 %v1861
        %v2226 = vunpack.c.h.b16 %v1861
        %v2227 = vunpack.c.l.b16 %v1862
        %v2228 = vunpack.c.h.b16 %v1862
        %v2229 = vunpack.c.l.b16 %v1863
        %v2230 = vunpack.c.h.b16 %v1863
        %v2231 = vunpack.c.l.b16 %v1864
        %v2232 = vunpack.c.h.b16 %v1864
        %v2233 = vunpack.c.l.b16 %v1865
        %v2234 = vunpack.c.h.b16 %v1865
        %v2235 = vunpack.c.l.b16 %v1866
        %v2236 = vunpack.c.h.b16 %v1866
        %v2237 = vunpack.c.l.b16 %v1867
        %v2238 = vunpack.c.h.b16 %v1867
        %v2239 = vunpack.c.l.b16 %v1868
        %v2240 = vunpack.c.h.b16 %v1868
        %v2241 = vunpack.c.l.b16 %v1869
        %v2242 = vunpack.c.h.b16 %v1869
        %v2243 = vunpack.c.l.b16 %v1870
        %v2244 = vunpack.c.h.b16 %v1870
        %v2245 = vunpack.c.l.b16 %v1871
        %v2246 = vunpack.c.h.b16 %v1871
        %v2247 = vunpack.c.l.b16 %v1872
        %v2248 = vunpack.c.h.b16 %v1872
        %v2249 = vunpack.c.l.b16 %v1873
        %v2250 = vunpack.c.h.b16 %v1873
        %v2251 = vunpack.c.l.b16 %v1874
        %v2252 = vunpack.c.h.b16 %v1874
        %v2253 = vunpack.c.l.b16 %v1875
        %v2254 = vunpack.c.h.b16 %v1875
        %v2255 = vunpack.c.l.b16 %v1876
        %v2256 = vunpack.c.h.b16 %v1876
        %v2257 = vunpack.c.l.b16 %v1877
        %v2258 = vunpack.c.h.b16 %v1877
        %v2259 = vunpack.c.l.b16 %v1878
        %v2260 = vunpack.c.h.b16 %v1878
        %v2261 = vunpack.c.l.b16 %v1879
        %v2262 = vunpack.c.h.b16 %v1879
        %v2263 = vunpack.c.l.b16 %v1880
        %v2264 = vunpack.c.h.b16 %v1880
        %v2265 = vunpack.c.l.b16 %v1881
        %v2266 = vunpack.c.h.b16 %v1881
        %v2267 = vunpack.c.l.b16 %v1882
        %v2268 = vunpack.c.h.b16 %v1882
        %v2269 = vunpack.c.l.b16 %v1883
        %v2270 = vunpack.c.h.b16 %v1883
        %v2271 = vunpack.c.l.b16 %v1884
        %v2272 = vunpack.c.h.b16 %v1884
        %v2273 = vunpack.c.l.b16 %v1885
        %v2274 = vunpack.c.h.b16 %v1885
        %v2275 = vunpack.c.l.b16 %v1886
        %v2276 = vunpack.c.h.b16 %v1886
        %v2277 = vunpack.c.l.b16 %v1887
        %v2278 = vunpack.c.h.b16 %v1887
        %v2279 = vunpack.c.l.b16 %v1888
        %v2280 = vunpack.c.h.b16 %v1888
        %v2281 = vunpack.c.l.b16 %v1889
        %v2282 = vunpack.c.h.b16 %v1889
        %v2283 = vunpack.c.l.b16 %v1890
        %v2284 = vunpack.c.h.b16 %v1890
        %v2285 = vunpack.c.l.b16 %v1891
        %v2286 = vunpack.c.h.b16 %v1891
        %v2287 = vunpack.c.l.b16 %v1892
        %v2288 = vunpack.c.h.b16 %v1892
        %v2289 = vunpack.c.l.b16 %v1893
        %v2290 = vunpack.c.h.b16 %v1893
        %v2291 = vunpack.c.l.b16 %v1894
        %v2292 = vunpack.c.h.b16 %v1894
        %v2293 = vunpack.c.l.b16 %v1895
        %v2294 = vunpack.c.h.b16 %v1895
        %v2295 = vunpack.c.l.b16 %v1896
        %v2296 = vunpack.c.h.b16 %v1896
        %v2297 = vunpack.c.l.b16 %v1897
        %v2298 = vunpack.c.h.b16 %v1897
        %v2299 = vunpack.c.l.b16 %v1898
        %v2300 = vunpack.c.h.b16 %v1898
        %v2301 = vunpack.c.l.b16 %v1899
        %v2302 = vunpack.c.h.b16 %v1899
        %v2303 = vunpack.c.l.b16 %v1900
        %v2304 = vunpack.c.h.b16 %v1900
        %v2305 = vunpack.c.l.b16 %v1901
        %v2306 = vunpack.c.h.b16 %v1901
        %v2307 = vunpack.c.l.b16 %v1902
        %v2308 = vunpack.c.h.b16 %v1902
        %v2309 = vunpack.c.l.b16 %v1903
        %v2310 = vunpack.c.h.b16 %v1903
        %v2311 = vunpack.c.l.b16 %v1904
        %v2312 = vunpack.c.h.b16 %v1904
        %v2313 = vunpack.c.l.b16 %v1905
        %v2314 = vunpack.c.h.b16 %v1905
        %v2315 = vunpack.c.l.b16 %v1906
        %v2316 = vunpack.c.h.b16 %v1906
        %v2317 = vunpack.c.l.b16 %v1907
        %v2318 = vunpack.c.h.b16 %v1907
        %v2319 = vunpack.c.l.b16 %v1908
        %v2320 = vunpack.c.h.b16 %v1908
        %v2321 = vunpack.c.l.b16 %v1909
        %v2322 = vunpack.c.h.b16 %v1909
        %v2323 = vunpack.c.l.b16 %v1910
        %v2324 = vunpack.c.h.b16 %v1910
        %v2325 = vunpack.c.l.b16 %v1911
        %v2326 = vunpack.c.h.b16 %v1911
        %v2327 = vunpack.c.l.b16 %v1912
        %v2328 = vunpack.c.h.b16 %v1912
        %v2329 = vpack.c.b16 %v2205, %v2201
        %v2330 = vpack.c.b16 %v2206, %v2202
        %v2331 = vpack.c.b16 %v2207, %v2203
        %v2332 = vpack.c.b16 %v2208, %v2204
        %v2333 = vpack.c.b16 %v2213, %v2209
        %v2334 = vpack.c.b16 %v2214, %v2210
        %v2335 = vpack.c.b16 %v2215, %v2211
        %v2336 = vpack.c.b16 %v2216, %v2212
        %v2337 = vpack.c.b16 %v2221, %v2217
        %v2338 = vpack.c.b16 %v2222, %v2218
        %v2339 = vpack.c.b16 %v2223, %v2219
        %v2340 = vpack.c.b16 %v2224, %v2220
        %v2341 = vpack.c.b16 %v2229, %v2225
        %v2342 = vpack.c.b16 %v2230, %v2226
        %v2343 = vpack.c.b16 %v2231, %v2227
        %v2344 = vpack.c.b16 %v2232, %v2228
        %v2345 = vpack.c.b16 %v2237, %v2233
        %v2346 = vpack.c.b16 %v2238, %v2234
        %v2347 = vpack.c.b16 %v2239, %v2235
        %v2348 = vpack.c.b16 %v2240, %v2236
        %v2349 = vpack.c.b16 %v2245, %v2241
        %v2350 = vpack.c.b16 %v2246, %v2242
        %v2351 = vpack.c.b16 %v2247, %v2243
        %v2352 = vpack.c.b16 %v2248, %v2244
        %v2353 = vpack.c.b16 %v2253, %v2249
        %v2354 = vpack.c.b16 %v2254, %v2250
        %v2355 = vpack.c.b16 %v2255, %v2251
        %v2356 = vpack.c.b16 %v2256, %v2252
        %v2357 = vpack.c.b16 %v2261, %v2257
        %v2358 = vpack.c.b16 %v2262, %v2258
        %v2359 = vpack.c.b16 %v2263, %v2259
        %v2360 = vpack.c.b16 %v2264, %v2260
        %v2361 = vpack.c.b16 %v2269, %v2265
        %v2362 = vpack.c.b16 %v2270, %v2266
        %v2363 = vpack.c.b16 %v2271, %v2267
        %v2364 = vpack.c.b16 %v2272, %v2268
        %v2365 = vpack.c.b16 %v2277, %v2273
        %v2366 = vpack.c.b16 %v2278, %v2274
        %v2367 = vpack.c.b16 %v2279, %v2275
        %v2368 = vpack.c.b16 %v2280, %v2276
        %v2369 = vpack.c.b16 %v2285, %v2281
        %v2370 = vpack.c.b16 %v2286, %v2282
        %v2371 = vpack.c.b16 %v2287, %v2283
        %v2372 = vpack.c.b16 %v2288, %v2284
        %v2373 = vpack.c.b16 %v2293, %v2289
        %v2374 = vpack.c.b16 %v2294, %v2290
        %v2375 = vpack.c.b16 %v2295, %v2291
        %v2376 = vpack.c.b16 %v2296, %v2292
        %v2377 = vpack.c.b16 %v2301, %v2297
        %v2378 = vpack.c.b16 %v2302, %v2298
        %v2379 = vpack.c.b16 %v2303, %v2299
        %v2380 = vpack.c.b16 %v2304, %v2300
        %v2381 = vpack.c.b16 %v2309, %v2305
        %v2382 = vpack.c.b16 %v2310, %v2306
        %v2383 = vpack.c.b16 %v2311, %v2307
        %v2384 = vpack.c.b16 %v2312, %v2308
        %v2385 = vpack.c.b16 %v2317, %v2313
        %v2386 = vpack.c.b16 %v2318, %v2314
        %v2387 = vpack.c.b16 %v2319, %v2315
        %v2388 = vpack.c.b16 %v2320, %v2316
        %v2389 = vpack.c.b16 %v2325, %v2321
        %v2390 = vpack.c.b16 %v2326, %v2322
        %v2391 = vpack.c.b16 %v2327, %v2323
        %v2392 = vpack.c.b16 %v2328, %v2324
        %2457 = vmatprep.subr.bf16.mxu0 0
        %2458 = vmatpush1.bf16.msra.mxu0 %v1920
        %2459 = vmatprep.subr.bf16.mxu0 0
        %2460 = vmatpush1.bf16.msra.mxu0 %v1919
        %2461 = vmatprep.subr.bf16.mxu0 0
        %2462 = vmatpush1.bf16.msra.mxu0 %v1918
        %2463 = vmatprep.subr.bf16.mxu0 0
        %2464 = vmatpush1.bf16.msra.mxu0 %v1917
        %2465 = vmatprep.subr.bf16.mxu0 0
        %2466 = vmatpush1.bf16.msra.mxu0 %v1916
        %2467 = vmatprep.subr.bf16.mxu0 0
        %2468 = vmatpush1.bf16.msra.mxu0 %v1915
        %2469 = vmatprep.subr.bf16.mxu0 0
        %2470 = vmatpush1.bf16.msra.mxu0 %v1914
        %2471 = vmatprep.subr.bf16.mxu0 0
        %2472 = vmatpush1.bf16.msra.mxu0 %v1913
        %2473 = vmatprep.subr.bf16.mxu0 0
        %2474 = vmatpush2.bf16.msra.mxu0 %v1928
        %2475 = vmatprep.subr.bf16.mxu0 0
        %2476 = vmatpush2.bf16.msra.mxu0 %v1927
        %2477 = vmatprep.subr.bf16.mxu0 0
        %2478 = vmatpush2.bf16.msra.mxu0 %v1926
        %2479 = vmatprep.subr.bf16.mxu0 0
        %2480 = vmatpush2.bf16.msra.mxu0 %v1925
        %2481 = vmatprep.subr.bf16.mxu0 0
        %2482 = vmatpush2.bf16.msra.mxu0 %v1924
        %2483 = vmatprep.subr.bf16.mxu0 0
        %2484 = vmatpush2.bf16.msra.mxu0 %v1923
        %2485 = vmatprep.subr.bf16.mxu0 0
        %2486 = vmatpush2.bf16.msra.mxu0 %v1922
        %2487 = vmatprep.subr.bf16.mxu0 0
        %2488 = vmatpush2.bf16.msra.mxu0 %v1921
        %2489 = vmatprep.mubr.bf16.mxu0 %v2330
        %2490 = vmatmul.mubr.bf16.gmra.mxu0 %v2329
        %v2491 = vpop.f32.mrf.mxu0
        %v2492 = vadd.f32 %v1980, %v2491
        %v2493 = vpop.f32.mrf.mxu0
        %v2494 = vpop.f32.mrf.mxu0
        %v2495 = vadd.f32 %v1985, %v2494
        %v2496 = vpop.f32.mrf.mxu0
        %2497 = vmatprep.mubr.bf16.mxu0 %v2334
        %2498 = vmatmul.mubr.bf16.gmra.mxu0 %v2333
        %v2499 = vpop.f32.mrf.mxu0
        %v2500 = vadd.f32 %v1990, %v2499
        %v2501 = vpop.f32.mrf.mxu0
        %v2502 = vpop.f32.mrf.mxu0
        %v2503 = vadd.f32 %v1995, %v2502
        %v2504 = vpop.f32.mrf.mxu0
        %2505 = vmatprep.mubr.bf16.mxu0 %v2338
        %2506 = vmatmul.mubr.bf16.gmra.mxu0 %v2337
        %v2507 = vpop.f32.mrf.mxu0
        %v2508 = vadd.f32 %v2000, %v2507
        %v2509 = vpop.f32.mrf.mxu0
        %v2510 = vpop.f32.mrf.mxu0
        %v2511 = vadd.f32 %v2005, %v2510
        %v2512 = vpop.f32.mrf.mxu0
        %2513 = vmatprep.mubr.bf16.mxu0 %v2342
        %2514 = vmatmul.mubr.bf16.gmra.mxu0 %v2341
        %v2515 = vpop.f32.mrf.mxu0
        %v2516 = vadd.f32 %v2010, %v2515
        %v2517 = vpop.f32.mrf.mxu0
        %v2518 = vpop.f32.mrf.mxu0
        %v2519 = vadd.f32 %v2015, %v2518
        %v2520 = vpop.f32.mrf.mxu0
        %2521 = vmatprep.mubr.bf16.mxu0 %v2346
        %2522 = vmatmul.mubr.bf16.gmra.mxu0 %v2345
        %v2523 = vpop.f32.mrf.mxu0
        %v2524 = vadd.f32 %v2020, %v2523
        %v2525 = vpop.f32.mrf.mxu0
        %v2526 = vpop.f32.mrf.mxu0
        %v2527 = vadd.f32 %v2025, %v2526
        %v2528 = vpop.f32.mrf.mxu0
        %2529 = vmatprep.mubr.bf16.mxu0 %v2350
        %2530 = vmatmul.mubr.bf16.gmra.mxu0 %v2349
        %v2531 = vpop.f32.mrf.mxu0
        %v2532 = vadd.f32 %v2030, %v2531
        %v2533 = vpop.f32.mrf.mxu0
        %v2534 = vpop.f32.mrf.mxu0
        %v2535 = vadd.f32 %v2035, %v2534
        %v2536 = vpop.f32.mrf.mxu0
        %2537 = vmatprep.mubr.bf16.mxu0 %v2354
        %2538 = vmatmul.mubr.bf16.gmra.mxu0 %v2353
        %v2539 = vpop.f32.mrf.mxu0
        %v2540 = vadd.f32 %v2040, %v2539
        %v2541 = vpop.f32.mrf.mxu0
        %v2542 = vpop.f32.mrf.mxu0
        %v2543 = vadd.f32 %v2045, %v2542
        %v2544 = vpop.f32.mrf.mxu0
        %2545 = vmatprep.mubr.bf16.mxu0 %v2358
        %2546 = vmatmul.mubr.bf16.gmra.mxu0 %v2357
        %v2547 = vpop.f32.mrf.mxu0
        %v2548 = vadd.f32 %v2050, %v2547
        %v2549 = vpop.f32.mrf.mxu0
        %v2550 = vpop.f32.mrf.mxu0
        %v2551 = vadd.f32 %v2055, %v2550
        %v2552 = vpop.f32.mrf.mxu0
        %2553 = vmatprep.mubr.bf16.mxu0 %v2362
        %2554 = vmatmul.mubr.bf16.gmra.mxu0 %v2361
        %v2555 = vpop.f32.mrf.mxu0
        %v2556 = vadd.f32 %v2060, %v2555
        %v2557 = vpop.f32.mrf.mxu0
        %v2558 = vpop.f32.mrf.mxu0
        %v2559 = vadd.f32 %v2065, %v2558
        %v2560 = vpop.f32.mrf.mxu0
        %2561 = vmatprep.mubr.bf16.mxu0 %v2366
        %2562 = vmatmul.mubr.bf16.gmra.mxu0 %v2365
        %v2563 = vpop.f32.mrf.mxu0
        %v2564 = vadd.f32 %v2070, %v2563
        %v2565 = vpop.f32.mrf.mxu0
        %v2566 = vpop.f32.mrf.mxu0
        %v2567 = vadd.f32 %v2075, %v2566
        %v2568 = vpop.f32.mrf.mxu0
        %2569 = vmatprep.mubr.bf16.mxu0 %v2370
        %2570 = vmatmul.mubr.bf16.gmra.mxu0 %v2369
        %v2571 = vpop.f32.mrf.mxu0
        %v2572 = vadd.f32 %v2080, %v2571
        %v2573 = vpop.f32.mrf.mxu0
        %v2574 = vpop.f32.mrf.mxu0
        %v2575 = vadd.f32 %v2085, %v2574
        %v2576 = vpop.f32.mrf.mxu0
        %2577 = vmatprep.mubr.bf16.mxu0 %v2374
        %2578 = vmatmul.mubr.bf16.gmra.mxu0 %v2373
        %v2579 = vpop.f32.mrf.mxu0
        %v2580 = vadd.f32 %v2090, %v2579
        %v2581 = vpop.f32.mrf.mxu0
        %v2582 = vpop.f32.mrf.mxu0
        %v2583 = vadd.f32 %v2095, %v2582
        %v2584 = vpop.f32.mrf.mxu0
        %2585 = vmatprep.mubr.bf16.mxu0 %v2378
        %2586 = vmatmul.mubr.bf16.gmra.mxu0 %v2377
        %v2587 = vpop.f32.mrf.mxu0
        %v2588 = vadd.f32 %v2100, %v2587
        %v2589 = vpop.f32.mrf.mxu0
        %v2590 = vpop.f32.mrf.mxu0
        %v2591 = vadd.f32 %v2105, %v2590
        %v2592 = vpop.f32.mrf.mxu0
        %2593 = vmatprep.mubr.bf16.mxu0 %v2382
        %2594 = vmatmul.mubr.bf16.gmra.mxu0 %v2381
        %v2595 = vpop.f32.mrf.mxu0
        %v2596 = vadd.f32 %v2110, %v2595
        %v2597 = vpop.f32.mrf.mxu0
        %v2598 = vpop.f32.mrf.mxu0
        %v2599 = vadd.f32 %v2115, %v2598
        %v2600 = vpop.f32.mrf.mxu0
        %2601 = vmatprep.mubr.bf16.mxu0 %v2386
        %2602 = vmatmul.mubr.bf16.gmra.mxu0 %v2385
        %v2603 = vpop.f32.mrf.mxu0
        %v2604 = vadd.f32 %v2120, %v2603
        %v2605 = vpop.f32.mrf.mxu0
        %v2606 = vpop.f32.mrf.mxu0
        %v2607 = vadd.f32 %v2125, %v2606
        %v2608 = vpop.f32.mrf.mxu0
        %2609 = vmatprep.mubr.bf16.mxu0 %v2390
        %2610 = vmatmul.mubr.bf16.gmra.mxu0 %v2389
        %v2611 = vpop.f32.mrf.mxu0
        %v2612 = vadd.f32 %v2130, %v2611
        %v2613 = vpop.f32.mrf.mxu0
        %v2614 = vpop.f32.mrf.mxu0
        %v2615 = vadd.f32 %v2135, %v2614
        %v2616 = vpop.f32.mrf.mxu0
        %2617 = vdwg.mxu0
        %2618 = vmatprep.subr.bf16.mxu0 0
        %2619 = vmatpush1.bf16.msra.mxu0 %v1936
        %2620 = vmatprep.subr.bf16.mxu0 0
        %2621 = vmatpush1.bf16.msra.mxu0 %v1935
        %2622 = vmatprep.subr.bf16.mxu0 0
        %2623 = vmatpush1.bf16.msra.mxu0 %v1934
        %2624 = vmatprep.subr.bf16.mxu0 0
        %2625 = vmatpush1.bf16.msra.mxu0 %v1933
        %2626 = vmatprep.subr.bf16.mxu0 0
        %2627 = vmatpush1.bf16.msra.mxu0 %v1932
        %2628 = vmatprep.subr.bf16.mxu0 0
        %2629 = vmatpush1.bf16.msra.mxu0 %v1931
        %2630 = vmatprep.subr.bf16.mxu0 0
        %2631 = vmatpush1.bf16.msra.mxu0 %v1930
        %2632 = vmatprep.subr.bf16.mxu0 0
        %2633 = vmatpush1.bf16.msra.mxu0 %v1929
        %2634 = vmatprep.subr.bf16.mxu0 0
        %2635 = vmatpush2.bf16.msra.mxu0 %v1944
        %2636 = vmatprep.subr.bf16.mxu0 0
        %2637 = vmatpush2.bf16.msra.mxu0 %v1943
        %2638 = vmatprep.subr.bf16.mxu0 0
        %2639 = vmatpush2.bf16.msra.mxu0 %v1942
        %2640 = vmatprep.subr.bf16.mxu0 0
        %2641 = vmatpush2.bf16.msra.mxu0 %v1941
        %2642 = vmatprep.subr.bf16.mxu0 0
        %2643 = vmatpush2.bf16.msra.mxu0 %v1940
        %2644 = vmatprep.subr.bf16.mxu0 0
        %2645 = vmatpush2.bf16.msra.mxu0 %v1939
        %2646 = vmatprep.subr.bf16.mxu0 0
        %2647 = vmatpush2.bf16.msra.mxu0 %v1938
        %2648 = vmatprep.subr.bf16.mxu0 0
        %2649 = vmatpush2.bf16.msra.mxu0 %v1937
        %2650 = vmatprep.mubr.bf16.mxu0 %v2332
        %2651 = vmatmul.mubr.bf16.gmra.mxu0 %v2331
        %v2652 = vpop.f32.mrf.mxu0
        %v2653 = vadd.f32 %v2492, %v2652
        %v2654 = vpop.f32.mrf.mxu0
        %v2655 = vpop.f32.mrf.mxu0
        %v2656 = vadd.f32 %v2495, %v2655
        %v2657 = vpop.f32.mrf.mxu0
        %2658 = vmatprep.mubr.bf16.mxu0 %v2336
        %2659 = vmatmul.mubr.bf16.gmra.mxu0 %v2335
        %v2660 = vpop.f32.mrf.mxu0
        %v2661 = vadd.f32 %v2500, %v2660
        %v2662 = vpop.f32.mrf.mxu0
        %v2663 = vpop.f32.mrf.mxu0
        %v2664 = vadd.f32 %v2503, %v2663
        %v2665 = vpop.f32.mrf.mxu0
        %2666 = vmatprep.mubr.bf16.mxu0 %v2340
        %2667 = vmatmul.mubr.bf16.gmra.mxu0 %v2339
        %v2668 = vpop.f32.mrf.mxu0
        %v2669 = vadd.f32 %v2508, %v2668
        %v2670 = vpop.f32.mrf.mxu0
        %v2671 = vpop.f32.mrf.mxu0
        %v2672 = vadd.f32 %v2511, %v2671
        %v2673 = vpop.f32.mrf.mxu0
        %2674 = vmatprep.mubr.bf16.mxu0 %v2344
        %2675 = vmatmul.mubr.bf16.gmra.mxu0 %v2343
        %v2676 = vpop.f32.mrf.mxu0
        %v2677 = vadd.f32 %v2516, %v2676
        %v2678 = vpop.f32.mrf.mxu0
        %v2679 = vpop.f32.mrf.mxu0
        %v2680 = vadd.f32 %v2519, %v2679
        %v2681 = vpop.f32.mrf.mxu0
        %2682 = vmatprep.mubr.bf16.mxu0 %v2348
        %2683 = vmatmul.mubr.bf16.gmra.mxu0 %v2347
        %v2684 = vpop.f32.mrf.mxu0
        %v2685 = vadd.f32 %v2524, %v2684
        %v2686 = vpop.f32.mrf.mxu0
        %v2687 = vpop.f32.mrf.mxu0
        %v2688 = vadd.f32 %v2527, %v2687
        %v2689 = vpop.f32.mrf.mxu0
        %2690 = vmatprep.mubr.bf16.mxu0 %v2352
        %2691 = vmatmul.mubr.bf16.gmra.mxu0 %v2351
        %v2692 = vpop.f32.mrf.mxu0
        %v2693 = vadd.f32 %v2532, %v2692
        %v2694 = vpop.f32.mrf.mxu0
        %v2695 = vpop.f32.mrf.mxu0
        %v2696 = vadd.f32 %v2535, %v2695
        %v2697 = vpop.f32.mrf.mxu0
        %2698 = vmatprep.mubr.bf16.mxu0 %v2356
        %2699 = vmatmul.mubr.bf16.gmra.mxu0 %v2355
        %v2700 = vpop.f32.mrf.mxu0
        %v2701 = vadd.f32 %v2540, %v2700
        %v2702 = vpop.f32.mrf.mxu0
        %v2703 = vpop.f32.mrf.mxu0
        %v2704 = vadd.f32 %v2543, %v2703
        %v2705 = vpop.f32.mrf.mxu0
        %2706 = vmatprep.mubr.bf16.mxu0 %v2360
        %2707 = vmatmul.mubr.bf16.gmra.mxu0 %v2359
        %v2708 = vpop.f32.mrf.mxu0
        %v2709 = vadd.f32 %v2548, %v2708
        %v2710 = vpop.f32.mrf.mxu0
        %v2711 = vpop.f32.mrf.mxu0
        %v2712 = vadd.f32 %v2551, %v2711
        %v2713 = vpop.f32.mrf.mxu0
        %2714 = vmatprep.mubr.bf16.mxu0 %v2364
        %2715 = vmatmul.mubr.bf16.gmra.mxu0 %v2363
        %v2716 = vpop.f32.mrf.mxu0
        %v2717 = vadd.f32 %v2556, %v2716
        %v2718 = vpop.f32.mrf.mxu0
        %v2719 = vpop.f32.mrf.mxu0
        %v2720 = vadd.f32 %v2559, %v2719
        %v2721 = vpop.f32.mrf.mxu0
        %2722 = vmatprep.mubr.bf16.mxu0 %v2368
        %2723 = vmatmul.mubr.bf16.gmra.mxu0 %v2367
        %v2724 = vpop.f32.mrf.mxu0
        %v2725 = vadd.f32 %v2564, %v2724
        %v2726 = vpop.f32.mrf.mxu0
        %v2727 = vpop.f32.mrf.mxu0
        %v2728 = vadd.f32 %v2567, %v2727
        %v2729 = vpop.f32.mrf.mxu0
        %2730 = vmatprep.mubr.bf16.mxu0 %v2372
        %2731 = vmatmul.mubr.bf16.gmra.mxu0 %v2371
        %v2732 = vpop.f32.mrf.mxu0
        %v2733 = vadd.f32 %v2572, %v2732
        %v2734 = vpop.f32.mrf.mxu0
        %v2735 = vpop.f32.mrf.mxu0
        %v2736 = vadd.f32 %v2575, %v2735
        %v2737 = vpop.f32.mrf.mxu0
        %2738 = vmatprep.mubr.bf16.mxu0 %v2376
        %2739 = vmatmul.mubr.bf16.gmra.mxu0 %v2375
        %v2740 = vpop.f32.mrf.mxu0
        %v2741 = vadd.f32 %v2580, %v2740
        %v2742 = vpop.f32.mrf.mxu0
        %v2743 = vpop.f32.mrf.mxu0
        %v2744 = vadd.f32 %v2583, %v2743
        %v2745 = vpop.f32.mrf.mxu0
        %2746 = vmatprep.mubr.bf16.mxu0 %v2380
        %2747 = vmatmul.mubr.bf16.gmra.mxu0 %v2379
        %v2748 = vpop.f32.mrf.mxu0
        %v2749 = vadd.f32 %v2588, %v2748
        %v2750 = vpop.f32.mrf.mxu0
        %v2751 = vpop.f32.mrf.mxu0
        %v2752 = vadd.f32 %v2591, %v2751
        %v2753 = vpop.f32.mrf.mxu0
        %2754 = vmatprep.mubr.bf16.mxu0 %v2384
        %2755 = vmatmul.mubr.bf16.gmra.mxu0 %v2383
        %v2756 = vpop.f32.mrf.mxu0
        %v2757 = vadd.f32 %v2596, %v2756
        %v2758 = vpop.f32.mrf.mxu0
        %v2759 = vpop.f32.mrf.mxu0
        %v2760 = vadd.f32 %v2599, %v2759
        %v2761 = vpop.f32.mrf.mxu0
        %2762 = vmatprep.mubr.bf16.mxu0 %v2388
        %2763 = vmatmul.mubr.bf16.gmra.mxu0 %v2387
        %v2764 = vpop.f32.mrf.mxu0
        %v2765 = vadd.f32 %v2604, %v2764
        %v2766 = vpop.f32.mrf.mxu0
        %v2767 = vpop.f32.mrf.mxu0
        %v2768 = vadd.f32 %v2607, %v2767
        %v2769 = vpop.f32.mrf.mxu0
        %2770 = vmatprep.mubr.bf16.mxu0 %v2392
        %2771 = vmatmul.mubr.bf16.gmra.mxu0 %v2391
        %v2772 = vpop.f32.mrf.mxu0
        %v2773 = vadd.f32 %v2612, %v2772
        %v2774 = vpop.f32.mrf.mxu0
        %v2775 = vpop.f32.mrf.mxu0
        %v2776 = vadd.f32 %v2615, %v2775
        %v2777 = vpop.f32.mrf.mxu0
        %2778 = vdwg.mxu0
        %v2779 = vmax.f32 %v2653, 0.0
        %v2780 = vmax.f32 %v2656, 0.0
        %v2781 = vmax.f32 %v2661, 0.0
        %v2782 = vmax.f32 %v2664, 0.0
        %v2783 = vmax.f32 %v2669, 0.0
        %v2784 = vmax.f32 %v2672, 0.0
        %v2785 = vmax.f32 %v2677, 0.0
        %v2786 = vmax.f32 %v2680, 0.0
        %v2787 = vmax.f32 %v2685, 0.0
        %v2788 = vmax.f32 %v2688, 0.0
        %v2789 = vmax.f32 %v2693, 0.0
        %v2790 = vmax.f32 %v2696, 0.0
        %v2791 = vmax.f32 %v2701, 0.0
        %v2792 = vmax.f32 %v2704, 0.0
        %v2793 = vmax.f32 %v2709, 0.0
        %v2794 = vmax.f32 %v2712, 0.0
        %v2795 = vmax.f32 %v2717, 0.0
        %v2796 = vmax.f32 %v2720, 0.0
        %v2797 = vmax.f32 %v2725, 0.0
        %v2798 = vmax.f32 %v2728, 0.0
        %v2799 = vmax.f32 %v2733, 0.0
        %v2800 = vmax.f32 %v2736, 0.0
        %v2801 = vmax.f32 %v2741, 0.0
        %v2802 = vmax.f32 %v2744, 0.0
        %v2803 = vmax.f32 %v2749, 0.0
        %v2804 = vmax.f32 %v2752, 0.0
        %v2805 = vmax.f32 %v2757, 0.0
        %v2806 = vmax.f32 %v2760, 0.0
        %v2807 = vmax.f32 %v2765, 0.0
        %v2808 = vmax.f32 %v2768, 0.0
        %v2809 = vmax.f32 %v2773, 0.0
        %v2810 = vmax.f32 %v2776, 0.0
        %v2811 = vld [vmem:[%s5] sm:$0xff]
        %v2812 = vld [vmem:[%s5 + $0x8] sm:$0xff]
        %v2813 = vld [vmem:[%s5 + $0x10] sm:$0xff]
        %v2814 = vld [vmem:[%s5 + $0x18] sm:$0xff]
        %v2815 = vld [vmem:[%s5 + $0x20] sm:$0xff]
        %v2816 = vld [vmem:[%s5 + $0x28] sm:$0xff]
        %v2817 = vld [vmem:[%s5 + $0x30] sm:$0xff]
        %v2818 = vld [vmem:[%s5 + $0x38] sm:$0xff]
        %v2819 = vld [vmem:[%s5 + $0x40] sm:$0xff]
        %v2820 = vld [vmem:[%s5 + $0x48] sm:$0xff]
        %v2821 = vld [vmem:[%s5 + $0x50] sm:$0xff]
        %v2822 = vld [vmem:[%s5 + $0x58] sm:$0xff]
        %v2823 = vld [vmem:[%s5 + $0x60] sm:$0xff]
        %v2824 = vld [vmem:[%s5 + $0x68] sm:$0xff]
        %v2825 = vld [vmem:[%s5 + $0x70] sm:$0xff]
        %v2826 = vld [vmem:[%s5 + $0x78] sm:$0xff]
        %v2827 = vld [vmem:[%s5 + $0x80] sm:$0xff]
        %v2828 = vld [vmem:[%s5 + $0x88] sm:$0xff]
        %v2829 = vld [vmem:[%s5 + $0x90] sm:$0xff]
        %v2830 = vld [vmem:[%s5 + $0x98] sm:$0xff]
        %v2831 = vld [vmem:[%s5 + $0xa0] sm:$0xff]
        %v2832 = vld [vmem:[%s5 + $0xa8] sm:$0xff]
        %v2833 = vld [vmem:[%s5 + $0xb0] sm:$0xff]
        %v2834 = vld [vmem:[%s5 + $0xb8] sm:$0xff]
        %v2835 = vld [vmem:[%s5 + $0xc0] sm:$0xff]
        %v2836 = vld [vmem:[%s5 + $0xc8] sm:$0xff]
        %v2837 = vld [vmem:[%s5 + $0xd0] sm:$0xff]
        %v2838 = vld [vmem:[%s5 + $0xd8] sm:$0xff]
        %v2839 = vld [vmem:[%s5 + $0xe0] sm:$0xff]
        %v2840 = vld [vmem:[%s5 + $0xe8] sm:$0xff]
        %v2841 = vld [vmem:[%s5 + $0xf0] sm:$0xff]
        %v2842 = vld [vmem:[%s5 + $0xf8] sm:$0xff]
        %2844 = vset.pattern.permute.xlu0 0
        %2845 = vperm.xlu0 %2844, %v2811
        %v2846 = vpop.permute.xlu0 %2845
        %2849 = vset.pattern.permute.xlu0 0
        %2850 = vperm.xlu0 %2849, %v2812
        %v2851 = vpop.permute.xlu0 %2850
        %2854 = vset.pattern.permute.xlu0 0
        %2855 = vperm.xlu0 %2854, %v2813
        %v2856 = vpop.permute.xlu0 %2855
        %2859 = vset.pattern.permute.xlu0 0
        %2860 = vperm.xlu0 %2859, %v2814
        %v2861 = vpop.permute.xlu0 %2860
        %2864 = vset.pattern.permute.xlu0 0
        %2865 = vperm.xlu0 %2864, %v2815
        %v2866 = vpop.permute.xlu0 %2865
        %2869 = vset.pattern.permute.xlu0 0
        %2870 = vperm.xlu0 %2869, %v2816
        %v2871 = vpop.permute.xlu0 %2870
        %2874 = vset.pattern.permute.xlu0 0
        %2875 = vperm.xlu0 %2874, %v2817
        %v2876 = vpop.permute.xlu0 %2875
        %2879 = vset.pattern.permute.xlu0 0
        %2880 = vperm.xlu0 %2879, %v2818
        %v2881 = vpop.permute.xlu0 %2880
        %2884 = vset.pattern.permute.xlu0 0
        %2885 = vperm.xlu0 %2884, %v2819
        %v2886 = vpop.permute.xlu0 %2885
        %2889 = vset.pattern.permute.xlu0 0
        %2890 = vperm.xlu0 %2889, %v2820
        %v2891 = vpop.permute.xlu0 %2890
        %2894 = vset.pattern.permute.xlu0 0
        %2895 = vperm.xlu0 %2894, %v2821
        %v2896 = vpop.permute.xlu0 %2895
        %2899 = vset.pattern.permute.xlu0 0
        %2900 = vperm.xlu0 %2899, %v2822
        %v2901 = vpop.permute.xlu0 %2900
        %2904 = vset.pattern.permute.xlu0 0
        %2905 = vperm.xlu0 %2904, %v2823
        %v2906 = vpop.permute.xlu0 %2905
        %2909 = vset.pattern.permute.xlu0 0
        %2910 = vperm.xlu0 %2909, %v2824
        %v2911 = vpop.permute.xlu0 %2910
        %2914 = vset.pattern.permute.xlu0 0
        %2915 = vperm.xlu0 %2914, %v2825
        %v2916 = vpop.permute.xlu0 %2915
        %2919 = vset.pattern.permute.xlu0 0
        %2920 = vperm.xlu0 %2919, %v2826
        %v2921 = vpop.permute.xlu0 %2920
        %2924 = vset.pattern.permute.xlu0 0
        %2925 = vperm.xlu0 %2924, %v2827
        %v2926 = vpop.permute.xlu0 %2925
        %2929 = vset.pattern.permute.xlu0 0
        %2930 = vperm.xlu0 %2929, %v2828
        %v2931 = vpop.permute.xlu0 %2930
        %2934 = vset.pattern.permute.xlu0 0
        %2935 = vperm.xlu0 %2934, %v2829
        %v2936 = vpop.permute.xlu0 %2935
        %2939 = vset.pattern.permute.xlu0 0
        %2940 = vperm.xlu0 %2939, %v2830
        %v2941 = vpop.permute.xlu0 %2940
        %2944 = vset.pattern.permute.xlu0 0
        %2945 = vperm.xlu0 %2944, %v2831
        %v2946 = vpop.permute.xlu0 %2945
        %2949 = vset.pattern.permute.xlu0 0
        %2950 = vperm.xlu0 %2949, %v2832
        %v2951 = vpop.permute.xlu0 %2950
        %2954 = vset.pattern.permute.xlu0 0
        %2955 = vperm.xlu0 %2954, %v2833
        %v2956 = vpop.permute.xlu0 %2955
        %2959 = vset.pattern.permute.xlu0 0
        %2960 = vperm.xlu0 %2959, %v2834
        %v2961 = vpop.permute.xlu0 %2960
        %2964 = vset.pattern.permute.xlu0 0
        %2965 = vperm.xlu0 %2964, %v2835
        %v2966 = vpop.permute.xlu0 %2965
        %2969 = vset.pattern.permute.xlu0 0
        %2970 = vperm.xlu0 %2969, %v2836
        %v2971 = vpop.permute.xlu0 %2970
        %2974 = vset.pattern.permute.xlu0 0
        %2975 = vperm.xlu0 %2974, %v2837
        %v2976 = vpop.permute.xlu0 %2975
        %2979 = vset.pattern.permute.xlu0 0
        %2980 = vperm.xlu0 %2979, %v2838
        %v2981 = vpop.permute.xlu0 %2980
        %2984 = vset.pattern.permute.xlu0 0
        %2985 = vperm.xlu0 %2984, %v2839
        %v2986 = vpop.permute.xlu0 %2985
        %2989 = vset.pattern.permute.xlu0 0
        %2990 = vperm.xlu0 %2989, %v2840
        %v2991 = vpop.permute.xlu0 %2990
        %2994 = vset.pattern.permute.xlu0 0
        %2995 = vperm.xlu0 %2994, %v2841
        %v2996 = vpop.permute.xlu0 %2995
        %2999 = vset.pattern.permute.xlu0 0
        %3000 = vperm.xlu0 %2999, %v2842
        %v3001 = vpop.permute.xlu0 %3000
        %v3003 = vmul.f32 %v2779, %v2846
        %v3004 = vmul.f32 %v2780, %v2851
        %v3005 = vmul.f32 %v2781, %v2856
        %v3006 = vmul.f32 %v2782, %v2861
        %v3007 = vmul.f32 %v2783, %v2866
        %v3008 = vmul.f32 %v2784, %v2871
        %v3009 = vmul.f32 %v2785, %v2876
        %v3010 = vmul.f32 %v2786, %v2881
        %v3011 = vmul.f32 %v2787, %v2886
        %v3012 = vmul.f32 %v2788, %v2891
        %v3013 = vmul.f32 %v2789, %v2896
        %v3014 = vmul.f32 %v2790, %v2901
        %v3015 = vmul.f32 %v2791, %v2906
        %v3016 = vmul.f32 %v2792, %v2911
        %v3017 = vmul.f32 %v2793, %v2916
        %v3018 = vmul.f32 %v2794, %v2921
        %v3019 = vmul.f32 %v2795, %v2926
        %v3020 = vmul.f32 %v2796, %v2931
        %v3021 = vmul.f32 %v2797, %v2936
        %v3022 = vmul.f32 %v2798, %v2941
        %v3023 = vmul.f32 %v2799, %v2946
        %v3024 = vmul.f32 %v2800, %v2951
        %v3025 = vmul.f32 %v2801, %v2956
        %v3026 = vmul.f32 %v2802, %v2961
        %v3027 = vmul.f32 %v2803, %v2966
        %v3028 = vmul.f32 %v2804, %v2971
        %v3029 = vmul.f32 %v2805, %v2976
        %v3030 = vmul.f32 %v2806, %v2981
        %v3031 = vmul.f32 %v2807, %v2986
        %v3032 = vmul.f32 %v2808, %v2991
        %v3033 = vmul.f32 %v2809, %v2996
        %v3034 = vmul.f32 %v2810, %v3001
        %v3035 = vadd.f32 %v3003, %v3004
        %v3036 = vadd.f32 %v3035, %v3005
        %v3037 = vadd.f32 %v3036, %v3006
        %v3038 = vadd.f32 %v3037, %v3007
        %v3039 = vadd.f32 %v3038, %v3008
        %v3040 = vadd.f32 %v3039, %v3009
        %v3041 = vadd.f32 %v3040, %v3010
        %v3042 = vadd.f32 %v3041, %v3011
        %v3043 = vadd.f32 %v3042, %v3012
        %v3044 = vadd.f32 %v3043, %v3013
        %v3045 = vadd.f32 %v3044, %v3014
        %v3046 = vadd.f32 %v3045, %v3015
        %v3047 = vadd.f32 %v3046, %v3016
        %v3048 = vadd.f32 %v3047, %v3017
        %v3049 = vadd.f32 %v3048, %v3018
        %v3050 = vadd.f32 %v3049, %v3019
        %v3051 = vadd.f32 %v3050, %v3020
        %v3052 = vadd.f32 %v3051, %v3021
        %v3053 = vadd.f32 %v3052, %v3022
        %v3054 = vadd.f32 %v3053, %v3023
        %v3055 = vadd.f32 %v3054, %v3024
        %v3056 = vadd.f32 %v3055, %v3025
        %v3057 = vadd.f32 %v3056, %v3026
        %v3058 = vadd.f32 %v3057, %v3027
        %v3059 = vadd.f32 %v3058, %v3028
        %v3060 = vadd.f32 %v3059, %v3029
        %v3061 = vadd.f32 %v3060, %v3030
        %v3062 = vadd.f32 %v3061, %v3031
        %v3063 = vadd.f32 %v3062, %v3032
        %v3064 = vadd.f32 %v3063, %v3033
        %v3065 = vadd.f32 %v3064, %v3034
        %v3066 = vrot.slane %v3065, 4
        %v3067 = vadd.f32 %v3065, %v3066
        %v3068 = vrot.slane %v3067, 2
        %v3069 = vadd.f32 %v3067, %v3068
        %v3070 = vrot.slane %v3069, 1
        %v3071 = vadd.f32 %v3069, %v3070
        %v3072 = vld [vmem:[#allocation3] sm:$0x1]
        %3074 = vset.pattern.permute.xlu0 0
        %3075 = vperm.xlu0 %3074, %v3072
        %v3076 = vpop.permute.xlu0 %3075
        %v3078 = vlaneseq
        %v3079 = vshrl.u32 %v3078, 7
        %v3080 = vsub.s32 0, %v3079
        %v3081 = vrot.slane %v3076, %v3080
        %v3082 = vadd.f32 %v3071, %v3081
        %v3083 = vxor.u32 %v3082, 2147483648
        %v3084 = vmul.f32 %v3083, 1.442695
        %v3085 = vpow.pop %v3084
        %v3086 = vadd.f32 %v3085, 1.0
        %v3087 = vrcp.pop %v3086
        %v3088 = vmul.f32 1.0, %v3087
        %3089 = vst [vmem:[%s318] sm:$0x1] %v3088
      $region56: #{fake_news_classifier_forward.1} parent=47 // pred_fallthru
        _
      %p3090 = scmp.lt.s32.totalorder %s24, 2
      %s3091 = scalar_select %p3090, %s24, 2
      %s3092 = scalar_lea.vmem %s7, %s3091
      // Predicated region
      $region57: #{fake_news_classifier_forward.1} parent=47 // pred_check
        %p3093 = pneg %p209
      $region58: #{fake_news_classifier_forward.1} parent=47 // pred_check_branch
        %3095 = sbr.rel (%p3093) target = $region60
      $region59: #{fake_news_classifier_forward.1} parent=47 // pred_region
        _
      $region60: #{fake_news_classifier_forward.1} parent=47 // pred_fallthru
        _
    $region48: #{fake_news_classifier_forward.1} parent=5 // pred_fallthru
      _
    %p3096 = scmp.le.s32.totalorder 2, %s15
    // Predicated region
    $region61: #{fake_news_classifier_forward.1} parent=5 // pred_check
      %p3097 = pneg %p3096
    $region62: #{fake_news_classifier_forward.1} parent=5 // pred_check_branch
      %3099 = sbr.rel (%p3097) target = $region64
    $region63: #{fake_news_classifier_forward.1} parent=5 // pred_region
      %s3100 = ssub.s32 %s15, 2
      // Predicated region
      $region65: #{fake_news_classifier_forward.1} parent=63 // pred_check
        %p3101 = pneg %p215
      $region66: #{fake_news_classifier_forward.1} parent=63 // pred_check_branch
        %3103 = sbr.rel (%p3101) target = $region68
      $region67: #{fake_news_classifier_forward.1} parent=63 // pred_region
        %p3104 = scmp.lt.s32.totalorder %s26, 2
        %s3105 = scalar_select %p3104, %s26, 2
        %s3106 = scalar_lea.vmem %s7, %s3105
      $region68: #{fake_news_classifier_forward.1} parent=63 // pred_fallthru
        _
    $region64: #{fake_news_classifier_forward.1} parent=5 // pred_fallthru
      _
  $region6: #{fake_news_classifier_forward.1} parent=0 // loop_footer
    %s19 = sadd.s32 1, %s15
  $region7: #{fake_news_classifier_forward.1} parent=0 // loop_footer_branch
    %14 = sbr.rel target = $region3
  $region8: #{fake_news_classifier_forward.1} parent=0 // loop_exit
    _

</llo_original>
